<compile_context>
chip_gen: v5e
topology: v5e:2x2
jax: 0.10.0
libtpu: 0.0.40
codegen_flags: <defaults>
</compile_context>

<pallas_src>
import jax
import jax.numpy as jnp
from jax.experimental import pallas as pl
from jax.experimental.pallas import tpu as pltpu


def _round_up(x, m):
    return ((x + m - 1) // m) * m


def _tile_bytes(shape, dtype):
    """Rough VMEM footprint of one tile including (sublane, lane) layout padding."""
    itemsize = jnp.dtype(dtype).itemsize
    sub_unit = {4: 8, 2: 16, 1: 32}.get(itemsize, 8)
    lead = 1
    for d in shape[:-2]:
        lead *= d
    sub = shape[-2] if len(shape) >= 2 else 1
    lane = shape[-1]
    return lead * _round_up(sub, sub_unit) * _round_up(lane, 128) * itemsize


def metanet_kernel(emb_ref, maskadd_ref,
                   ek_w1_ref, ek_b1_ref, ek_w2_ref,
                   dec_w1_ref, dec_b1_ref, dec_w2_ref, dec_b2_ref,
                   out_ref, d_ref):
    j = pl.program_id(1)

    # The attention pooling + decoder hidden depend only on the batch tile, so
    # compute them once per batch tile (out_dim axis is innermost/"arbitrary")
    # and keep the result resident in the d_ref scratch across out_dim tiles.
    @pl.when(j == 0)
    def _compute_hidden():
        TB, S, E = emb_ref.shape
        wdt = ek_w1_ref.dtype                   # matmul operand dtype (bf16/f32)

        emb = emb_ref[...]                      # (TB, S, E), compute dtype
        emb2d = emb.reshape(TB * S, E)          # layout-preserving (S is padded)

        # ---- event_K: Linear(E,E) -> ReLU (MXU, f32 accumulation) ----
        h = jnp.dot(emb2d, ek_w1_ref[...],
                    preferred_element_type=jnp.float32) + ek_b1_ref[...]
        h = jnp.maximum(h, 0.0)

        # ---- event_K: Linear(E,1, no bias) as VPU multiply + lane reduce ----
        k = jnp.sum(h * ek_w2_ref[...], axis=-1, keepdims=True).reshape(TB, S)

        # ---- masked softmax over the sequence axis (f32) ----
        t = k + maskadd_ref[...]                # additive -1e8 mask from wrapper
        t = t - jnp.max(t, axis=1, keepdims=True)
        e = jnp.exp(t)
        att = e * pl.reciprocal(jnp.sum(e, axis=1, keepdims=True), approx=True)

        # ---- attention pooling: VPU multiply + sublane (S) reduce, f32 acc ----
        his = jnp.sum(att[:, :, None] * emb.astype(jnp.float32), axis=1)  # (TB,E)

        # ---- decoder hidden: Linear(E,M) -> ReLU, kept for all out_dim tiles ----
        d = jnp.dot(his.astype(wdt), dec_w1_ref[...],
                    preferred_element_type=jnp.float32) + dec_b1_ref[...]
        d_ref[...] = jnp.maximum(d, 0.0).astype(d_ref.dtype)

    # ---- decoder: Linear(M, E*E) for this out_dim tile ----
    out = jnp.dot(d_ref[...], dec_w2_ref[...],
                  preferred_element_type=jnp.float32) + dec_b2_ref[...]
    out_ref[...] = out.astype(out_ref.dtype)


def metanet_forward(emb_fea, seq_index, params, *,
                    block_b=256, block_n=None,
                    compute_dtype=jnp.bfloat16, out_dtype=jnp.float32,
                    vmem_budget_bytes=40 * 1024 * 1024):
    B, S, E = emb_fea.shape
    M = params["dec_w1"].shape[1]
    out_dim = params["dec_w2"].shape[1]          # E * E
    cdt = jnp.dtype(compute_dtype)
    odt = jnp.dtype(out_dtype)

    # ---- pad S to the sublane unit so (TB,S,E)->(TB*S,E) reshape is free ----
    sub_unit = 16 if cdt.itemsize == 2 else 8
    S_pad = _round_up(S, sub_unit)

    # ---- batch tile: multiple of 8, never a whole-B single-block fallback ----
    tb = max(8, min(_round_up(block_b, 8), _round_up(B, 8)))
    # Prefer >= 2 batch blocks so the "parallel" axis can feed v7x's 2nd core.
    if _round_up(B, tb) // tb < 2 and tb >= 16:
        tb = max(8, _round_up(tb // 2, 8))
    B_pad = _round_up(B, tb)
    num_b = B_pad // tb

    # ---- out_dim tile: largest multiple-of-128 divisor fitting the VMEM budget ----
    def vmem_estimate(tn):
        tot = 0
        tot += 2 * _tile_bytes((tb, S_pad, E), cdt)            # emb (double buffered)
        tot += 2 * _tile_bytes((tb, S_pad), jnp.float32)       # additive mask
        tot += 1 * _tile_bytes((E, E), cdt)                    # ek_w1  (single buffer)
        tot += 2 * _tile_bytes((1, E), jnp.float32)            # ek_b1, ek_w2
        tot += 1 * _tile_bytes((E, M), cdt)                    # dec_w1
        tot += 1 * _tile_bytes((1, M), jnp.float32)            # dec_b1
        tot += 2 * _tile_bytes((M, tn), cdt)                   # dec_w2 tile
        tot += 2 * _tile_bytes((1, tn), jnp.float32)           # dec_b2 tile
        tot += 2 * _tile_bytes((tb, tn), odt)                  # out tile
        tot += 1 * _tile_bytes((tb, M), cdt)                   # decoder-hidden scratch
        return tot

    if block_n is not None:
        tn = block_n
    elif out_dim % 128 == 0:
        cands = [d for d in range(out_dim, 0, -128) if out_dim % d == 0]
        tn = cands[-1]
        for c in cands:                                        # largest that fits
            if vmem_estimate(c) <= vmem_budget_bytes:
                tn = c
                break
    else:
        tn = out_dim
    assert out_dim % tn == 0 and (tn % 128 == 0 or tn == out_dim)
    num_n = out_dim // tn

    vmem_limit = int(min(max(2 * vmem_estimate(tn), 32 * 1024 * 1024),
                         64 * 1024 * 1024))

    # ---- pad & cast inputs (emb handed to the kernel already in bf16) ----
    emb_p = jnp.pad(emb_fea.astype(jnp.float32),
                    ((0, B_pad - B), (0, S_pad - S), (0, 0))).astype(compute_dtype)
    mask_add = jnp.where(seq_index == 0, jnp.float32(-1e8), jnp.float32(0.0))
    mask_p = jnp.pad(mask_add, ((0, B_pad - B), (0, S_pad - S)),
                     constant_values=-1e8)

    # Lane-dense (1, N) biases; ek_w2 as a (1, E) row for the VPU reduce.
    ek_b1 = params["ek_b1"].reshape(1, E).astype(jnp.float32)
    dec_b1 = params["dec_b1"].reshape(1, M).astype(jnp.float32)
    dec_b2 = params["dec_b2"].reshape(1, out_dim).astype(jnp.float32)
    ek_w2 = params["ek_w2"].reshape(1, E).astype(jnp.float32)
    ek_w1 = params["ek_w1"].astype(compute_dtype)
    dec_w1 = params["dec_w1"].astype(compute_dtype)
    dec_w2 = params["dec_w2"].astype(compute_dtype)

    cost = pl.CostEstimate(
        flops=int(2 * B_pad * S_pad * E * E        # event_K Linear(E,E)
                  + 2 * B_pad * S_pad * E          # E->1 projection
                  + 2 * B_pad * S_pad * E          # attention pooling
                  + 2 * B_pad * E * M              # decoder Linear(E,M)
                  + 2 * B_pad * M * out_dim),      # decoder Linear(M, E*E)
        transcendentals=int(B_pad * S_pad + B_pad),
        bytes_accessed=int(emb_p.size * cdt.itemsize + mask_p.size * 4
                           + B_pad * out_dim * odt.itemsize
                           + (E * E + E * M + M * out_dim) * cdt.itemsize
                           + (3 * E + M + out_dim) * 4),
    )

    def build(weight_pipeline_mode):
        def const_spec(shape):
            n = len(shape)
            return pl.BlockSpec(shape, lambda i, j, _n=n: (0,) * _n,
                                pipeline_mode=weight_pipeline_mode)

        return pl.pallas_call(
            metanet_kernel,
            out_shape=jax.ShapeDtypeStruct((B_pad, out_dim), out_dtype),
            grid=(num_b, num_n),
            in_specs=[
                # batch-tiled activations (auto double-buffered; constant over j)
                pl.BlockSpec((tb, S_pad, E), lambda i, j: (i, 0, 0)),
                pl.BlockSpec((tb, S_pad), lambda i, j: (i, 0)),
                # grid-invariant weights / biases (VMEM-resident)
                const_spec((E, E)),                # ek_w1
                const_spec((1, E)),                # ek_b1
                const_spec((1, E)),                # ek_w2 row
                const_spec((E, M)),                # dec_w1
                const_spec((1, M)),                # dec_b1
                # out_dim-tiled decoder output weights
                pl.BlockSpec((M, tn), lambda i, j: (0, j)),
                pl.BlockSpec((1, tn), lambda i, j: (0, j)),
            ],
            out_specs=pl.BlockSpec((tb, tn), lambda i, j: (i, j)),
            scratch_shapes=[pltpu.VMEM((tb, M), compute_dtype)],
            compiler_params=pltpu.CompilerParams(
                dimension_semantics=("parallel", "arbitrary"),  # megacore on v7x
                vmem_limit_bytes=vmem_limit,
            ),
            cost_estimate=cost,
        )

    args = (emb_p, mask_p, ek_w1, ek_b1, ek_w2, dec_w1, dec_b1, dec_w2, dec_b2)
    try:
        # Single-buffer the grid-invariant weights (halves their VMEM footprint).
        out_padded = build(pl.Buffered(buffer_count=1))(*args)
    except Exception:
        # Fallback for jax builds that reject pipeline_mode / buffer_count=1.
        out_padded = build(None)(*args)

    return out_padded[:B]


def init_params(key, emb_dim, meta_dim):
    ks = jax.random.split(key, 8)
    s = 0.1
    return {
        # event_K: Linear(E,E) + bias, Linear(E,1) no bias
        "ek_w1": s * jax.random.normal(ks[0], (emb_dim, emb_dim), jnp.float32),
        "ek_b1": s * jax.random.normal(ks[1], (emb_dim,), jnp.float32),
        "ek_w2": s * jax.random.normal(ks[2], (emb_dim, 1), jnp.float32),
        # decoder: Linear(E,M) + bias, Linear(M, E*E) + bias
        "dec_w1": s * jax.random.normal(ks[3], (emb_dim, meta_dim), jnp.float32),
        "dec_b1": s * jax.random.normal(ks[4], (meta_dim,), jnp.float32),
        "dec_w2": s * jax.random.normal(ks[5], (meta_dim, emb_dim * emb_dim), jnp.float32),
        "dec_b2": s * jax.random.normal(ks[6], (emb_dim * emb_dim,), jnp.float32),
    }


def metanet_forward_ref(emb_fea, seq_index, p):
    """Pure-JAX reference mirroring the PyTorch forward pass."""
    mask = (seq_index == 0).astype(jnp.float32)
    h = jnp.maximum(emb_fea @ p["ek_w1"] + p["ek_b1"], 0.0)
    k = (h @ p["ek_w2"])[..., 0]                          # (B, S)
    t = k - mask * 1e8
    att = jax.nn.softmax(t, axis=1)
    his = jnp.sum(att[:, :, None] * emb_fea, axis=1)      # (B, E)
    d = jnp.maximum(his @ p["dec_w1"] + p["dec_b1"], 0.0)
    return d @ p["dec_w2"] + p["dec_b2"]                  # (B, E*E)


if __name__ == "__main__":
    B, S, E, M = 2, 8, 16, 8                              # batch, seq, emb_dim, meta_dim

    key = jax.random.PRNGKey(0)
    k_emb, k_seq, k_par = jax.random.split(key, 3)

    emb_fea = jax.random.normal(k_emb, (B, S, E), jnp.float32)
    # some positions are 0 (padding) so the mask path is exercised
    seq_index = jax.random.randint(k_seq, (B, S), 0, 5, jnp.int32)
    params = init_params(k_par, E, M)

    ref = metanet_forward_ref(emb_fea, seq_index, params)

    # f32 matmul-operand path (only the approx softmax reciprocal differs).
    out_f32 = jax.block_until_ready(
        metanet_forward(emb_fea, seq_index, params, compute_dtype=jnp.float32))
    assert out_f32.shape == (B, E * E)
    assert jnp.allclose(out_f32, ref, atol=2e-3, rtol=2e-3)

    # Default path: bf16 matmul operands + bf16 emb input, f32 accumulation and
    # f32 softmax / pooling, f32 output.
    out_bf16 = jax.block_until_ready(metanet_forward(emb_fea, seq_index, params))
    assert out_bf16.shape == (B, E * E)
    assert jnp.allclose(out_bf16, ref, atol=5e-2, rtol=5e-2)

    # Exercise the out_dim grid axis (tn=128 -> 2 tiles) and the bf16 output
    # (writeback-traffic) path.
    out_tiled = jax.block_until_ready(
        metanet_forward(emb_fea, seq_index, params,
                        block_n=128, out_dtype=jnp.bfloat16))
    assert out_tiled.shape == (B, E * E) and out_tiled.dtype == jnp.bfloat16
    assert jnp.allclose(out_tiled.astype(jnp.float32), ref, atol=1e-1, rtol=1e-1)

    print("KERNEL_OK")
</pallas_src>

<mosaic_0001>
module attributes {stable_mosaic.version = 11 : i64} {
  func.func @metanet_kernel(%arg0: i32, %arg1: i32, %arg2: memref<8x8x16xf32, #tpu.memory_space<vmem>>, %arg3: memref<8x8xf32, #tpu.memory_space<vmem>>, %arg4: memref<16x16xf32, #tpu.memory_space<vmem>>, %arg5: memref<1x16xf32, #tpu.memory_space<vmem>>, %arg6: memref<1x16xf32, #tpu.memory_space<vmem>>, %arg7: memref<16x8xf32, #tpu.memory_space<vmem>>, %arg8: memref<1x8xf32, #tpu.memory_space<vmem>>, %arg9: memref<8x256xf32, #tpu.memory_space<vmem>>, %arg10: memref<1x256xf32, #tpu.memory_space<vmem>>, %arg11: memref<8x256xf32, #tpu.memory_space<vmem>>, %arg12: memref<8x8xf32, #tpu.memory_space<vmem>>) attributes {dimension_semantics = [#tpu.dimension_semantics<parallel>, #tpu.dimension_semantics<arbitrary>], iteration_bounds = array<i64: 1, 1>, scalar_prefetch = 0 : i64, scratch_operands = 1 : i64, tpu.core_type = #tpu.core_type<tc>, window_params = [{transform_indices = @transform_0, window_bounds = array<i64: 8, 8, 16>}, {transform_indices = @transform_1, window_bounds = array<i64: 8, 8>}, {pipeline_mode = #tpu.pipeline_mode<synchronous>, transform_indices = @transform_2, window_bounds = array<i64: 16, 16>}, {pipeline_mode = #tpu.pipeline_mode<synchronous>, transform_indices = @transform_3, window_bounds = array<i64: 1, 16>}, {pipeline_mode = #tpu.pipeline_mode<synchronous>, transform_indices = @transform_4, window_bounds = array<i64: 1, 16>}, {pipeline_mode = #tpu.pipeline_mode<synchronous>, transform_indices = @transform_5, window_bounds = array<i64: 16, 8>}, {pipeline_mode = #tpu.pipeline_mode<synchronous>, transform_indices = @transform_6, window_bounds = array<i64: 1, 8>}, {transform_indices = @transform_7, window_bounds = array<i64: 8, 256>}, {transform_indices = @transform_8, window_bounds = array<i64: 1, 256>}, {transform_indices = @transform_9, window_bounds = array<i64: 8, 256>}]} {
    %c0_i32 = arith.constant 0 : i32
    %0 = arith.cmpi eq, %arg1, %c0_i32 : i32
    %1 = arith.extui %0 : i1 to i32
    %c0_i32_0 = arith.constant 0 : i32
    %2 = arith.cmpi ne, %1, %c0_i32_0 : i32
    scf.if %2 {
      %c0_8 = arith.constant 0 : index
      %c0_9 = arith.constant 0 : index
      %c0_10 = arith.constant 0 : index
      %10 = vector.load %arg2[%c0_8, %c0_9, %c0_10] : memref<8x8x16xf32, #tpu.memory_space<vmem>>, vector<8x8x16xf32>
      %11 = vector.shape_cast %10 : vector<8x8x16xf32> to vector<64x16xf32>
      %c0_11 = arith.constant 0 : index
      %c0_12 = arith.constant 0 : index
      %12 = vector.load %arg4[%c0_11, %c0_12] : memref<16x16xf32, #tpu.memory_space<vmem>>, vector<16x16xf32>
      %cst_13 = arith.constant dense<0.000000e+00> : vector<64x16xf32>
      %13 = tpu.matmul %11, %12, %cst_13 {dimension_numbers = #tpu.dot_dimension_numbers<[1], [0], [0], [1], [0, 0, 1, 1], [], []>} : vector<64x16xf32>, vector<16x16xf32>, vector<64x16xf32> -> vector<64x16xf32>
      %c0_14 = arith.constant 0 : index
      %c0_15 = arith.constant 0 : index
      %14 = vector.load %arg5[%c0_14, %c0_15] : memref<1x16xf32, #tpu.memory_space<vmem>>, vector<1x16xf32>
      %15 = vector.broadcast %14 : vector<1x16xf32> to vector<64x16xf32>
      %16 = arith.addf %13, %15 : vector<64x16xf32>
      %cst_16 = arith.constant 0.000000e+00 : f32
      %17 = vector.broadcast %cst_16 : f32 to vector<64x16xf32>
      %18 = arith.maximumf %16, %17 : vector<64x16xf32>
      %c0_17 = arith.constant 0 : index
      %c0_18 = arith.constant 0 : index
      %19 = vector.load %arg6[%c0_17, %c0_18] : memref<1x16xf32, #tpu.memory_space<vmem>>, vector<1x16xf32>
      %20 = vector.broadcast %19 : vector<1x16xf32> to vector<64x16xf32>
      %21 = arith.mulf %18, %20 : vector<64x16xf32>
      %cst_19 = arith.constant dense<0.000000e+00> : vector<64xf32>
      %22 = vector.multi_reduction <add>, %21, %cst_19 [1] : vector<64x16xf32> to vector<64xf32>
      %23 = vector.shape_cast %22 : vector<64xf32> to vector<64x1xf32>
      %24 = vector.shape_cast %23 : vector<64x1xf32> to vector<8x8xf32>
      %c0_20 = arith.constant 0 : index
      %c0_21 = arith.constant 0 : index
      %25 = vector.load %arg3[%c0_20, %c0_21] : memref<8x8xf32, #tpu.memory_space<vmem>>, vector<8x8xf32>
      %26 = arith.addf %24, %25 : vector<8x8xf32>
      %cst_22 = arith.constant dense<0xFF800000> : vector<8xf32>
      %27 = vector.multi_reduction <maximumf>, %26, %cst_22 [1] : vector<8x8xf32> to vector<8xf32>
      %28 = vector.shape_cast %27 : vector<8xf32> to vector<8x1xf32>
      %29 = vector.broadcast %28 : vector<8x1xf32> to vector<8x8xf32>
      %30 = arith.subf %26, %29 : vector<8x8xf32>
      %31 = math.exp %30 : vector<8x8xf32>
      %cst_23 = arith.constant dense<0.000000e+00> : vector<8xf32>
      %32 = vector.multi_reduction <add>, %31, %cst_23 [1] : vector<8x8xf32> to vector<8xf32>
      %33 = vector.shape_cast %32 : vector<8xf32> to vector<8x1xf32>
      %34 = tpu.reciprocal %33 {approx = true} : vector<8x1xf32> -> vector<8x1xf32>
      %35 = vector.broadcast %34 : vector<8x1xf32> to vector<8x8xf32>
      %36 = arith.mulf %31, %35 : vector<8x8xf32>
      %37 = vector.shape_cast %36 : vector<8x8xf32> to vector<8x8x1xf32>
      %38 = vector.broadcast %37 : vector<8x8x1xf32> to vector<8x8x16xf32>
      %39 = arith.mulf %38, %10 : vector<8x8x16xf32>
      %cst_24 = arith.constant dense<0.000000e+00> : vector<8x16xf32>
      %40 = vector.multi_reduction <add>, %39, %cst_24 [1] : vector<8x8x16xf32> to vector<8x16xf32>
      %c0_25 = arith.constant 0 : index
      %c0_26 = arith.constant 0 : index
      %41 = vector.load %arg7[%c0_25, %c0_26] : memref<16x8xf32, #tpu.memory_space<vmem>>, vector<16x8xf32>
      %cst_27 = arith.constant dense<0.000000e+00> : vector<8x8xf32>
      %42 = tpu.matmul %40, %41, %cst_27 {dimension_numbers = #tpu.dot_dimension_numbers<[1], [0], [0], [1], [0, 0, 1, 1], [], []>} : vector<8x16xf32>, vector<16x8xf32>, vector<8x8xf32> -> vector<8x8xf32>
      %c0_28 = arith.constant 0 : index
      %c0_29 = arith.constant 0 : index
      %43 = vector.load %arg8[%c0_28, %c0_29] : memref<1x8xf32, #tpu.memory_space<vmem>>, vector<1x8xf32>
      %44 = vector.broadcast %43 : vector<1x8xf32> to vector<8x8xf32>
      %45 = arith.addf %42, %44 : vector<8x8xf32>
      %cst_30 = arith.constant 0.000000e+00 : f32
      %46 = vector.broadcast %cst_30 : f32 to vector<8x8xf32>
      %47 = arith.maximumf %45, %46 : vector<8x8xf32>
      %c0_31 = arith.constant 0 : index
      %c0_32 = arith.constant 0 : index
      %48 = vector.load %arg12[%c0_31, %c0_32] : memref<8x8xf32, #tpu.memory_space<vmem>>, vector<8x8xf32>
      tpu.vector_store %arg12[%c0_31, %c0_32], %47 {strides = array<i32>} : memref<8x8xf32, #tpu.memory_space<vmem>>, vector<8x8xf32>,
    } else {
    }
    %c0 = arith.constant 0 : index
    %c0_1 = arith.constant 0 : index
    %3 = vector.load %arg12[%c0, %c0_1] : memref<8x8xf32, #tpu.memory_space<vmem>>, vector<8x8xf32>
    %c0_2 = arith.constant 0 : index
    %c0_3 = arith.constant 0 : index
    %4 = vector.load %arg9[%c0_2, %c0_3] : memref<8x256xf32, #tpu.memory_space<vmem>>, vector<8x256xf32>
    %cst = arith.constant dense<0.000000e+00> : vector<8x256xf32>
    %5 = tpu.matmul %3, %4, %cst {dimension_numbers = #tpu.dot_dimension_numbers<[1], [0], [0], [1], [0, 0, 1, 1], [], []>} : vector<8x8xf32>, vector<8x256xf32>, vector<8x256xf32> -> vector<8x256xf32>
    %c0_4 = arith.constant 0 : index
    %c0_5 = arith.constant 0 : index
    %6 = vector.load %arg10[%c0_4, %c0_5] : memref<1x256xf32, #tpu.memory_space<vmem>>, vector<1x256xf32>
    %7 = vector.broadcast %6 : vector<1x256xf32> to vector<8x256xf32>
    %8 = arith.addf %5, %7 : vector<8x256xf32>
    %c0_6 = arith.constant 0 : index
    %c0_7 = arith.constant 0 : index
    %9 = vector.load %arg11[%c0_6, %c0_7] : memref<8x256xf32, #tpu.memory_space<vmem>>, vector<8x256xf32>
    tpu.vector_store %arg11[%c0_6, %c0_7], %8 {strides = array<i32>} : memref<8x256xf32, #tpu.memory_space<vmem>>, vector<8x256xf32>,
    return
  }
  func.func @transform_0(%arg0: i32, %arg1: i32) -> (i32, i32, i32) {
    %c0_i32 = arith.constant 0 : i32
    %c0_i32_0 = arith.constant 0 : i32
    %c0_i32_1 = arith.constant 0 : i32
    return %arg0, %c0_i32, %c0_i32_0 : i32, i32, i32
  }
  func.func @transform_1(%arg0: i32, %arg1: i32) -> (i32, i32) {
    %c0_i32 = arith.constant 0 : i32
    %c0_i32_0 = arith.constant 0 : i32
    return %arg0, %c0_i32 : i32, i32
  }
  func.func @transform_2(%arg0: i32, %arg1: i32) -> (i32, i32) {
    %c0_i32 = arith.constant 0 : i32
    %c0_i32_0 = arith.constant 0 : i32
    %c0_i32_1 = arith.constant 0 : i32
    return %c0_i32, %c0_i32_0 : i32, i32
  }
  func.func @transform_3(%arg0: i32, %arg1: i32) -> (i32, i32) {
    %c0_i32 = arith.constant 0 : i32
    %c0_i32_0 = arith.constant 0 : i32
    %c0_i32_1 = arith.constant 0 : i32
    return %c0_i32, %c0_i32_0 : i32, i32
  }
  func.func @transform_4(%arg0: i32, %arg1: i32) -> (i32, i32) {
    %c0_i32 = arith.constant 0 : i32
    %c0_i32_0 = arith.constant 0 : i32
    %c0_i32_1 = arith.constant 0 : i32
    return %c0_i32, %c0_i32_0 : i32, i32
  }
  func.func @transform_5(%arg0: i32, %arg1: i32) -> (i32, i32) {
    %c0_i32 = arith.constant 0 : i32
    %c0_i32_0 = arith.constant 0 : i32
    %c0_i32_1 = arith.constant 0 : i32
    return %c0_i32, %c0_i32_0 : i32, i32
  }
  func.func @transform_6(%arg0: i32, %arg1: i32) -> (i32, i32) {
    %c0_i32 = arith.constant 0 : i32
    %c0_i32_0 = arith.constant 0 : i32
    %c0_i32_1 = arith.constant 0 : i32
    return %c0_i32, %c0_i32_0 : i32, i32
  }
  func.func @transform_7(%arg0: i32, %arg1: i32) -> (i32, i32) {
    %c0_i32 = arith.constant 0 : i32
    %c0_i32_0 = arith.constant 0 : i32
    return %c0_i32, %arg1 : i32, i32
  }
  func.func @transform_8(%arg0: i32, %arg1: i32) -> (i32, i32) {
    %c0_i32 = arith.constant 0 : i32
    %c0_i32_0 = arith.constant 0 : i32
    return %c0_i32, %arg1 : i32, i32
  }
  func.func @transform_9(%arg0: i32, %arg1: i32) -> (i32, i32) {
    %c0_i32 = arith.constant 0 : i32
    return %arg0, %arg1 : i32, i32
  }
}

module attributes {stable_mosaic.version = 11 : i64} {
  func.func @metanet_kernel(%arg0: i32, %arg1: i32, %arg2: memref<8x8x16xf32, #tpu.memory_space<vmem>>, %arg3: memref<8x8xf32, #tpu.memory_space<vmem>>, %arg4: memref<16x16xf32, #tpu.memory_space<vmem>>, %arg5: memref<1x16xf32, #tpu.memory_space<vmem>>, %arg6: memref<1x16xf32, #tpu.memory_space<vmem>>, %arg7: memref<16x8xf32, #tpu.memory_space<vmem>>, %arg8: memref<1x8xf32, #tpu.memory_space<vmem>>, %arg9: memref<8x256xf32, #tpu.memory_space<vmem>>, %arg10: memref<1x256xf32, #tpu.memory_space<vmem>>, %arg11: memref<8x256xf32, #tpu.memory_space<vmem>>, %arg12: memref<8x8xf32, #tpu.memory_space<vmem>>) attributes {dimension_semantics = [#tpu.dimension_semantics<parallel>, #tpu.dimension_semantics<arbitrary>], iteration_bounds = array<i64: 1, 1>, scalar_prefetch = 0 : i64, scratch_operands = 1 : i64, tpu.core_type = #tpu.core_type<tc>, window_params = [{transform_indices = @transform_0, window_bounds = array<i64: 8, 8, 16>}, {transform_indices = @transform_1, window_bounds = array<i64: 8, 8>}, {pipeline_mode = #tpu.pipeline_mode<synchronous>, transform_indices = @transform_2, window_bounds = array<i64: 16, 16>}, {pipeline_mode = #tpu.pipeline_mode<synchronous>, transform_indices = @transform_3, window_bounds = array<i64: 1, 16>}, {pipeline_mode = #tpu.pipeline_mode<synchronous>, transform_indices = @transform_4, window_bounds = array<i64: 1, 16>}, {pipeline_mode = #tpu.pipeline_mode<synchronous>, transform_indices = @transform_5, window_bounds = array<i64: 16, 8>}, {pipeline_mode = #tpu.pipeline_mode<synchronous>, transform_indices = @transform_6, window_bounds = array<i64: 1, 8>}, {transform_indices = @transform_7, window_bounds = array<i64: 8, 256>}, {transform_indices = @transform_8, window_bounds = array<i64: 1, 256>}, {transform_indices = @transform_9, window_bounds = array<i64: 8, 256>}]} {
    %c0_i32 = arith.constant 0 : i32
    %0 = arith.cmpi eq, %arg1, %c0_i32 : i32
    %1 = arith.extui %0 : i1 to i32
    %c0_i32_0 = arith.constant 0 : i32
    %2 = arith.cmpi ne, %1, %c0_i32_0 : i32
    scf.if %2 {
      %c0_8 = arith.constant 0 : index
      %c0_9 = arith.constant 0 : index
      %c0_10 = arith.constant 0 : index
      %10 = vector.load %arg2[%c0_8, %c0_9, %c0_10] : memref<8x8x16xf32, #tpu.memory_space<vmem>>, vector<8x8x16xf32>
      %11 = vector.shape_cast %10 : vector<8x8x16xf32> to vector<64x16xf32>
      %c0_11 = arith.constant 0 : index
      %c0_12 = arith.constant 0 : index
      %12 = vector.load %arg4[%c0_11, %c0_12] : memref<16x16xf32, #tpu.memory_space<vmem>>, vector<16x16xf32>
      %cst_13 = arith.constant dense<0.000000e+00> : vector<64x16xf32>
      %13 = tpu.matmul %11, %12, %cst_13 {dimension_numbers = #tpu.dot_dimension_numbers<[1], [0], [0], [1], [0, 0, 1, 1], [], []>} : vector<64x16xf32>, vector<16x16xf32>, vector<64x16xf32> -> vector<64x16xf32>
      %c0_14 = arith.constant 0 : index
      %c0_15 = arith.constant 0 : index
      %14 = vector.load %arg5[%c0_14, %c0_15] : memref<1x16xf32, #tpu.memory_space<vmem>>, vector<1x16xf32>
      %15 = vector.broadcast %14 : vector<1x16xf32> to vector<64x16xf32>
      %16 = arith.addf %13, %15 : vector<64x16xf32>
      %cst_16 = arith.constant 0.000000e+00 : f32
      %17 = vector.broadcast %cst_16 : f32 to vector<64x16xf32>
      %18 = arith.maximumf %16, %17 : vector<64x16xf32>
      %c0_17 = arith.constant 0 : index
      %c0_18 = arith.constant 0 : index
      %19 = vector.load %arg6[%c0_17, %c0_18] : memref<1x16xf32, #tpu.memory_space<vmem>>, vector<1x16xf32>
      %20 = vector.broadcast %19 : vector<1x16xf32> to vector<64x16xf32>
      %21 = arith.mulf %18, %20 : vector<64x16xf32>
      %cst_19 = arith.constant dense<0.000000e+00> : vector<64xf32>
      %22 = vector.multi_reduction <add>, %21, %cst_19 [1] : vector<64x16xf32> to vector<64xf32>
      %23 = vector.shape_cast %22 : vector<64xf32> to vector<64x1xf32>
      %24 = vector.shape_cast %23 : vector<64x1xf32> to vector<8x8xf32>
      %c0_20 = arith.constant 0 : index
      %c0_21 = arith.constant 0 : index
      %25 = vector.load %arg3[%c0_20, %c0_21] : memref<8x8xf32, #tpu.memory_space<vmem>>, vector<8x8xf32>
      %26 = arith.addf %24, %25 : vector<8x8xf32>
      %cst_22 = arith.constant dense<0xFF800000> : vector<8xf32>
      %27 = vector.multi_reduction <maximumf>, %26, %cst_22 [1] : vector<8x8xf32> to vector<8xf32>
      %28 = vector.shape_cast %27 : vector<8xf32> to vector<8x1xf32>
      %29 = vector.broadcast %28 : vector<8x1xf32> to vector<8x8xf32>
      %30 = arith.subf %26, %29 : vector<8x8xf32>
      %31 = math.exp %30 : vector<8x8xf32>
      %cst_23 = arith.constant dense<0.000000e+00> : vector<8xf32>
      %32 = vector.multi_reduction <add>, %31, %cst_23 [1] : vector<8x8xf32> to vector<8xf32>
      %33 = vector.shape_cast %32 : vector<8xf32> to vector<8x1xf32>
      %34 = tpu.reciprocal %33 {approx = true} : vector<8x1xf32> -> vector<8x1xf32>
      %35 = vector.broadcast %34 : vector<8x1xf32> to vector<8x8xf32>
      %36 = arith.mulf %31, %35 : vector<8x8xf32>
      %37 = vector.shape_cast %36 : vector<8x8xf32> to vector<8x8x1xf32>
      %38 = vector.broadcast %37 : vector<8x8x1xf32> to vector<8x8x16xf32>
      %39 = arith.mulf %38, %10 : vector<8x8x16xf32>
      %cst_24 = arith.constant dense<0.000000e+00> : vector<8x16xf32>
      %40 = vector.multi_reduction <add>, %39, %cst_24 [1] : vector<8x8x16xf32> to vector<8x16xf32>
      %c0_25 = arith.constant 0 : index
      %c0_26 = arith.constant 0 : index
      %41 = vector.load %arg7[%c0_25, %c0_26] : memref<16x8xf32, #tpu.memory_space<vmem>>, vector<16x8xf32>
      %cst_27 = arith.constant dense<0.000000e+00> : vector<8x8xf32>
      %42 = tpu.matmul %40, %41, %cst_27 {dimension_numbers = #tpu.dot_dimension_numbers<[1], [0], [0], [1], [0, 0, 1, 1], [], []>} : vector<8x16xf32>, vector<16x8xf32>, vector<8x8xf32> -> vector<8x8xf32>
      %c0_28 = arith.constant 0 : index
      %c0_29 = arith.constant 0 : index
      %43 = vector.load %arg8[%c0_28, %c0_29] : memref<1x8xf32, #tpu.memory_space<vmem>>, vector<1x8xf32>
      %44 = vector.broadcast %43 : vector<1x8xf32> to vector<8x8xf32>
      %45 = arith.addf %42, %44 : vector<8x8xf32>
      %cst_30 = arith.constant 0.000000e+00 : f32
      %46 = vector.broadcast %cst_30 : f32 to vector<8x8xf32>
      %47 = arith.maximumf %45, %46 : vector<8x8xf32>
      %c0_31 = arith.constant 0 : index
      %c0_32 = arith.constant 0 : index
      %48 = vector.load %arg12[%c0_31, %c0_32] : memref<8x8xf32, #tpu.memory_space<vmem>>, vector<8x8xf32>
      tpu.vector_store %arg12[%c0_31, %c0_32], %47 {strides = array<i32>} : memref<8x8xf32, #tpu.memory_space<vmem>>, vector<8x8xf32>,
    } else {
    }
    %c0 = arith.constant 0 : index
    %c0_1 = arith.constant 0 : index
    %3 = vector.load %arg12[%c0, %c0_1] : memref<8x8xf32, #tpu.memory_space<vmem>>, vector<8x8xf32>
    %c0_2 = arith.constant 0 : index
    %c0_3 = arith.constant 0 : index
    %4 = vector.load %arg9[%c0_2, %c0_3] : memref<8x256xf32, #tpu.memory_space<vmem>>, vector<8x256xf32>
    %cst = arith.constant dense<0.000000e+00> : vector<8x256xf32>
    %5 = tpu.matmul %3, %4, %cst {dimension_numbers = #tpu.dot_dimension_numbers<[1], [0], [0], [1], [0, 0, 1, 1], [], []>} : vector<8x8xf32>, vector<8x256xf32>, vector<8x256xf32> -> vector<8x256xf32>
    %c0_4 = arith.constant 0 : index
    %c0_5 = arith.constant 0 : index
    %6 = vector.load %arg10[%c0_4, %c0_5] : memref<1x256xf32, #tpu.memory_space<vmem>>, vector<1x256xf32>
    %7 = vector.broadcast %6 : vector<1x256xf32> to vector<8x256xf32>
    %8 = arith.addf %5, %7 : vector<8x256xf32>
    %c0_6 = arith.constant 0 : index
    %c0_7 = arith.constant 0 : index
    %9 = vector.load %arg11[%c0_6, %c0_7] : memref<8x256xf32, #tpu.memory_space<vmem>>, vector<8x256xf32>
    tpu.vector_store %arg11[%c0_6, %c0_7], %8 {strides = array<i32>} : memref<8x256xf32, #tpu.memory_space<vmem>>, vector<8x256xf32>,
    return
  }
  func.func @transform_0(%arg0: i32, %arg1: i32) -> (i32, i32, i32) {
    %c0_i32 = arith.constant 0 : i32
    %c0_i32_0 = arith.constant 0 : i32
    %c0_i32_1 = arith.constant 0 : i32
    return %arg0, %c0_i32, %c0_i32_0 : i32, i32, i32
  }
  func.func @transform_1(%arg0: i32, %arg1: i32) -> (i32, i32) {
    %c0_i32 = arith.constant 0 : i32
    %c0_i32_0 = arith.constant 0 : i32
    return %arg0, %c0_i32 : i32, i32
  }
  func.func @transform_2(%arg0: i32, %arg1: i32) -> (i32, i32) {
    %c0_i32 = arith.constant 0 : i32
    %c0_i32_0 = arith.constant 0 : i32
    %c0_i32_1 = arith.constant 0 : i32
    return %c0_i32, %c0_i32_0 : i32, i32
  }
  func.func @transform_3(%arg0: i32, %arg1: i32) -> (i32, i32) {
    %c0_i32 = arith.constant 0 : i32
    %c0_i32_0 = arith.constant 0 : i32
    %c0_i32_1 = arith.constant 0 : i32
    return %c0_i32, %c0_i32_0 : i32, i32
  }
  func.func @transform_4(%arg0: i32, %arg1: i32) -> (i32, i32) {
    %c0_i32 = arith.constant 0 : i32
    %c0_i32_0 = arith.constant 0 : i32
    %c0_i32_1 = arith.constant 0 : i32
    return %c0_i32, %c0_i32_0 : i32, i32
  }
  func.func @transform_5(%arg0: i32, %arg1: i32) -> (i32, i32) {
    %c0_i32 = arith.constant 0 : i32
    %c0_i32_0 = arith.constant 0 : i32
    %c0_i32_1 = arith.constant 0 : i32
    return %c0_i32, %c0_i32_0 : i32, i32
  }
  func.func @transform_6(%arg0: i32, %arg1: i32) -> (i32, i32) {
    %c0_i32 = arith.constant 0 : i32
    %c0_i32_0 = arith.constant 0 : i32
    %c0_i32_1 = arith.constant 0 : i32
    return %c0_i32, %c0_i32_0 : i32, i32
  }
  func.func @transform_7(%arg0: i32, %arg1: i32) -> (i32, i32) {
    %c0_i32 = arith.constant 0 : i32
    %c0_i32_0 = arith.constant 0 : i32
    return %c0_i32, %arg1 : i32, i32
  }
  func.func @transform_8(%arg0: i32, %arg1: i32) -> (i32, i32) {
    %c0_i32 = arith.constant 0 : i32
    %c0_i32_0 = arith.constant 0 : i32
    return %c0_i32, %arg1 : i32, i32
  }
  func.func @transform_9(%arg0: i32, %arg1: i32) -> (i32, i32) {
    %c0_i32 = arith.constant 0 : i32
    return %arg0, %arg1 : i32, i32
  }
}

</mosaic_0001>

<llo_original>
// kernel: tpu_custom_call.1
$region0: #{tpu_custom_call.1}
  #allocation0 [shape = 'u32[]', space=smem, size = 0x4, offset = 0x4, fixed_abs, tag = 'smem constant byte address 0x4 - core index']
  #allocation1 [shape = 'u32[72,128]{1,0:T(1,128)}', space=vmem, size = 0x9000, scoped, tag = 'internal scratch']
  #allocation2 [shape = 'f32[8,8]{1,0:T(8,128)}', space=vmem, size = 0x1000, scoped, tag = 'scratch operand']
  %s0 = inlined_call_operand.hbm [shape: f32[8,8,16], index: 0, kind: input, shape index: {}]
  %s1 = inlined_call_operand.vmem [shape: f32[8,8], index: 1, kind: input, shape index: {}]
  %s2 = inlined_call_operand.vmem [shape: f32[16,16], index: 2, kind: input, shape index: {}]
  %s3 = inlined_call_operand.hbm [shape: f32[1,16], index: 3, kind: input, shape index: {}]
  %s4 = inlined_call_operand.vmem [shape: f32[1,16], index: 4, kind: input, shape index: {}]
  %s5 = inlined_call_operand.vmem [shape: f32[16,8], index: 5, kind: input, shape index: {}]
  %s6 = inlined_call_operand.vmem [shape: f32[1,8], index: 6, kind: input, shape index: {}]
  %s7 = inlined_call_operand.hbm [shape: f32[8,256], index: 7, kind: input, shape index: {}]
  %s8 = inlined_call_operand.vmem [shape: f32[1,256], index: 8, kind: input, shape index: {}]
  %s9 = inlined_call_operand.hbm [shape: f32[8,256], index: 9, kind: output, shape index: {}]
  %s10 = sld [smem:[#allocation0]]
  $region62: #{tpu_custom_call.1} parent=0
    _
  %s12 = ssub.s32 1, %s10
  %s13 = scalar_select 0, %s12, %s10
  $region1: #{tpu_custom_call.1} parent=0
    #allocation3 [shape = 'u8[32768]{0}', space=vmem, size = 0x8000, scoped, tag = 'input window, operand 0, single buffered']
    #allocation4 [shape = 's32[1]{0}', space=sflag, size = 0x4, scoped, tag = 'scoped memory for tpu_custom_call.1']
    #allocation5 [shape = 's32[1]{0}', space=sflag, size = 0x4, scoped, tag = 'scoped memory for tpu_custom_call.1']
    #allocation6 [shape = 'u8[512]{0}', space=vmem, size = 0x400, scoped, tag = 'input window, operand 3, single buffered']
    #allocation7 [shape = 's32[1]{0}', space=sflag, size = 0x4, scoped, tag = 'scoped memory for tpu_custom_call.1']
    #allocation8 [shape = 'u8[8192]{0}', space=vmem, size = 0x2000, scoped, tag = 'input window, operand 7, single buffered']
    #allocation9 [shape = 'u8[8192]{0}', space=vmem, size = 0x2000, scoped, tag = 'output window, operand 0, single buffered']
    %14 = vsyncpa [#allocation4], 0
    %15 = vsyncpa [#allocation7], 0
    %16 = vsyncpa [#allocation5], 0
    // Predicated region
    $region2: #{tpu_custom_call.1} parent=1 // pred_check
      _
    $region3: #{tpu_custom_call.1} parent=1 // pred_check_branch
      %18 = sbr.rel (0) target = $region5
    $region4: #{tpu_custom_call.1} parent=1 // pred_region
      %20 = vsyncadd [#allocation4], 0
      %s21 = sshll.u32 %s0, 4
      %s22 = int_to_ptr.hbm [resolvable:$true] %s21
      %s23 = sshll.u32 [#allocation3], 4
      %s24 = int_to_ptr.vmem [resolvable:$true] %s23
      %29 = dma.hbm_to_vmem [thread:$0]  %s22, 1024, %s24, [#allocation4], 128, 128, 8
    $region5: #{tpu_custom_call.1} parent=1 // pred_fallthru
      _
    // Predicated region
    $region6: #{tpu_custom_call.1} parent=1 // pred_check
      _
    $region7: #{tpu_custom_call.1} parent=1 // pred_check_branch
      %31 = sbr.rel (0) target = $region9
    $region8: #{tpu_custom_call.1} parent=1 // pred_region
      _
    $region9: #{tpu_custom_call.1} parent=1 // pred_fallthru
      _
    // Predicated region
    $region10: #{tpu_custom_call.1} parent=1 // pred_check
      _
    $region11: #{tpu_custom_call.1} parent=1 // pred_check_branch
      %33 = sbr.rel (0) target = $region13
    $region12: #{tpu_custom_call.1} parent=1 // pred_region
      _
    $region13: #{tpu_custom_call.1} parent=1 // pred_fallthru
      _
    // Predicated region
    $region14: #{tpu_custom_call.1} parent=1 // pred_check
      _
    $region15: #{tpu_custom_call.1} parent=1 // pred_check_branch
      %35 = sbr.rel (0) target = $region17
    $region16: #{tpu_custom_call.1} parent=1 // pred_region
      %37 = vsyncadd [#allocation7], 0
      %s39 = sshll.u32 %s3, 4
      %s40 = int_to_ptr.hbm [resolvable:$true] %s39
      %s41 = sshll.u32 [#allocation6], 4
      %s42 = int_to_ptr.vmem [resolvable:$true] %s41
      %44 = dma.hbm_to_vmem [thread:$0]  %s40, 16, %s42, [#allocation7]
    $region17: #{tpu_custom_call.1} parent=1 // pred_fallthru
      _
    // Predicated region
    $region18: #{tpu_custom_call.1} parent=1 // pred_check
      _
    $region19: #{tpu_custom_call.1} parent=1 // pred_check_branch
      %46 = sbr.rel (0) target = $region21
    $region20: #{tpu_custom_call.1} parent=1 // pred_region
      _
    $region21: #{tpu_custom_call.1} parent=1 // pred_fallthru
      _
    // Predicated region
    $region22: #{tpu_custom_call.1} parent=1 // pred_check
      _
    $region23: #{tpu_custom_call.1} parent=1 // pred_check_branch
      %48 = sbr.rel (0) target = $region25
    $region24: #{tpu_custom_call.1} parent=1 // pred_region
      _
    $region25: #{tpu_custom_call.1} parent=1 // pred_fallthru
      _
    // Predicated region
    $region26: #{tpu_custom_call.1} parent=1 // pred_check
      _
    $region27: #{tpu_custom_call.1} parent=1 // pred_check_branch
      %50 = sbr.rel (0) target = $region29
    $region28: #{tpu_custom_call.1} parent=1 // pred_region
      _
    $region29: #{tpu_custom_call.1} parent=1 // pred_fallthru
      _
    // Predicated region
    $region30: #{tpu_custom_call.1} parent=1 // pred_check
      _
    $region31: #{tpu_custom_call.1} parent=1 // pred_check_branch
      %52 = sbr.rel (0) target = $region33
    $region32: #{tpu_custom_call.1} parent=1 // pred_region
      %54 = vsyncadd [#allocation7], 0
      %s56 = sshll.u32 %s7, 4
      %s57 = int_to_ptr.hbm [resolvable:$true] %s56
      %s58 = sshll.u32 [#allocation8], 4
      %s59 = int_to_ptr.vmem [resolvable:$true] %s58
      %61 = dma.hbm_to_vmem [thread:$0]  %s57, 256, %s59, [#allocation7]
    $region33: #{tpu_custom_call.1} parent=1 // pred_fallthru
      _
    // Predicated region
    $region34: #{tpu_custom_call.1} parent=1 // pred_check
      _
    $region35: #{tpu_custom_call.1} parent=1 // pred_check_branch
      %63 = sbr.rel (0) target = $region37
    $region36: #{tpu_custom_call.1} parent=1 // pred_region
      _
    $region37: #{tpu_custom_call.1} parent=1 // pred_fallthru
      _
    // Predicated region
    $region38: #{tpu_custom_call.1} parent=1 // pred_check
      _
    $region39: #{tpu_custom_call.1} parent=1 // pred_check_branch
      %65 = sbr.rel (0) target = $region41
    $region40: #{tpu_custom_call.1} parent=1 // pred_region
      %67 = dma.done [#allocation4], 1024
    $region41: #{tpu_custom_call.1} parent=1 // pred_fallthru
      _
    // Predicated region
    $region42: #{tpu_custom_call.1} parent=1 // pred_check
      _
    $region43: #{tpu_custom_call.1} parent=1 // pred_check_branch
      %69 = sbr.rel (0) target = $region45
    $region44: #{tpu_custom_call.1} parent=1 // pred_region
      %71 = dma.done [#allocation7], 16
    $region45: #{tpu_custom_call.1} parent=1 // pred_fallthru
      _
    // Predicated region
    $region46: #{tpu_custom_call.1} parent=1 // pred_check
      _
    $region47: #{tpu_custom_call.1} parent=1 // pred_check_branch
      %73 = sbr.rel (0) target = $region49
    $region48: #{tpu_custom_call.1} parent=1 // pred_region
      %75 = dma.done [#allocation7], 256
    $region49: #{tpu_custom_call.1} parent=1 // pred_fallthru
      _
    %p76 = scmp.eq.s32.totalorder 0, 0
    // Predicated region
    $region50: #{tpu_custom_call.1} parent=1 // pred_check
      %p77 = pneg %p76
    $region51: #{tpu_custom_call.1} parent=1 // pred_check_branch
      %79 = sbr.rel (%p77) target = $region53
    $region52: #{tpu_custom_call.1} parent=1 // pred_region
      %v80 = vld [vmem:[#allocation3] sm:$0xff]
      %v81 = vld [vmem:[#allocation3 + $0x8] sm:$0xff]
      %v82 = vld [vmem:[#allocation3 + $0x10] sm:$0xff]
      %v83 = vld [vmem:[#allocation3 + $0x18] sm:$0xff]
      %v84 = vld [vmem:[#allocation3 + $0x20] sm:$0xff]
      %v85 = vld [vmem:[#allocation3 + $0x28] sm:$0xff]
      %v86 = vld [vmem:[#allocation3 + $0x30] sm:$0xff]
      %v87 = vld [vmem:[#allocation3 + $0x38] sm:$0xff]
      %v88 = vld [vmem:[%s2] sm:$0xff]
      %v89 = vld [vmem:[%s2 + $0x8] sm:$0xff]
      %v90 = vld [vmem:[#allocation6] sm:$0x1]
      %v92 = vperm.slane %v90, 0
      %vm94 = vcmask 130048
      %v96 = vsel %vm94, %v80, 0
      %v99 = vsel %vm94, %v81, 0
      %v102 = vsel %vm94, %v82, 0
      %v105 = vsel %vm94, %v83, 0
      %v108 = vsel %vm94, %v84, 0
      %v111 = vsel %vm94, %v85, 0
      %v114 = vsel %vm94, %v86, 0
      %v117 = vsel %vm94, %v87, 0
      %119 = vmatpush.msra.mxu0 0.0
      %120 = vmatpush.msra.mxu0 0.0
      %121 = vmatpush.msra.mxu0 0.0
      %122 = vmatpush.msra.mxu0 0.0
      %123 = vmatpush.msra.mxu0 0.0
      %124 = vmatpush.msra.mxu0 0.0
      %125 = vmatpush.msra.mxu0 0.0
      %126 = vmatpush.msra.mxu0 0.0
      %127 = vmatpush.msra.mxu0 0.0
      %128 = vmatpush.msra.mxu0 0.0
      %129 = vmatpush.msra.mxu0 0.0
      %130 = vmatpush.msra.mxu0 0.0
      %131 = vmatpush.msra.mxu0 0.0
      %132 = vmatpush.msra.mxu0 0.0
      %133 = vmatpush.msra.mxu0 %v89
      %134 = vmatpush.msra.mxu0 %v88
      %135 = vmatmul.f32.gmra.mxu0 %v96
      %v136 = vpop.f32.mrf.mxu0
      %v137 = vadd.f32 %v92, %v136
      %138 = vmatmul.f32.gmra.mxu0 %v99
      %v139 = vpop.f32.mrf.mxu0
      %v140 = vadd.f32 %v92, %v139
      %141 = vmatmul.f32.gmra.mxu0 %v102
      %v142 = vpop.f32.mrf.mxu0
      %v143 = vadd.f32 %v92, %v142
      %144 = vmatmul.f32.gmra.mxu0 %v105
      %v145 = vpop.f32.mrf.mxu0
      %v146 = vadd.f32 %v92, %v145
      %147 = vmatmul.f32.gmra.mxu0 %v108
      %v148 = vpop.f32.mrf.mxu0
      %v149 = vadd.f32 %v92, %v148
      %150 = vmatmul.f32.gmra.mxu0 %v111
      %v151 = vpop.f32.mrf.mxu0
      %v152 = vadd.f32 %v92, %v151
      %153 = vmatmul.f32.gmra.mxu0 %v114
      %v154 = vpop.f32.mrf.mxu0
      %v155 = vadd.f32 %v92, %v154
      %156 = vmatmul.f32.gmra.mxu0 %v117
      %v157 = vpop.f32.mrf.mxu0
      %v158 = vadd.f32 %v92, %v157
      %159 = vdwg.mxu0
      %v160 = vmax.f32 %v137, 0.0
      %v161 = vmax.f32 %v140, 0.0
      %v162 = vmax.f32 %v143, 0.0
      %v163 = vmax.f32 %v146, 0.0
      %v164 = vmax.f32 %v149, 0.0
      %v165 = vmax.f32 %v152, 0.0
      %v166 = vmax.f32 %v155, 0.0
      %v167 = vmax.f32 %v158, 0.0
      %v168 = vld [vmem:[%s4] sm:$0x1]
      %v170 = vperm.slane %v168, 0
      %v172 = vmul.f32 %v160, %v170
      %v173 = vmul.f32 %v161, %v170
      %v174 = vmul.f32 %v162, %v170
      %v175 = vmul.f32 %v163, %v170
      %v176 = vmul.f32 %v164, %v170
      %v177 = vmul.f32 %v165, %v170
      %v178 = vmul.f32 %v166, %v170
      %v179 = vmul.f32 %v167, %v170
      %v180 = vsel %vm94, %v172, 0.0
      %181 = vadd.xlane.f32.xlu0 %v180
      %v182 = vpop.xlane.xlu0 %181
      %v183 = vsel %vm94, %v173, 0.0
      %184 = vadd.xlane.f32.xlu0 %v183
      %v185 = vpop.xlane.xlu0 %184
      %v186 = vsel %vm94, %v174, 0.0
      %187 = vadd.xlane.f32.xlu0 %v186
      %v188 = vpop.xlane.xlu0 %187
      %v189 = vsel %vm94, %v175, 0.0
      %190 = vadd.xlane.f32.xlu0 %v189
      %v191 = vpop.xlane.xlu0 %190
      %v192 = vsel %vm94, %v176, 0.0
      %193 = vadd.xlane.f32.xlu0 %v192
      %v194 = vpop.xlane.xlu0 %193
      %v195 = vsel %vm94, %v177, 0.0
      %196 = vadd.xlane.f32.xlu0 %v195
      %v197 = vpop.xlane.xlu0 %196
      %v198 = vsel %vm94, %v178, 0.0
      %199 = vadd.xlane.f32.xlu0 %v198
      %v200 = vpop.xlane.xlu0 %199
      %v201 = vsel %vm94, %v179, 0.0
      %202 = vadd.xlane.f32.xlu0 %v201
      %v203 = vpop.xlane.xlu0 %202
      %v204 = vld [vmem:[%s1] sm:$0xff]
      %v206 = vperm.slane %v204, 0
      %v207 = vlaneseq
      %v208 = vshrl.u32 %v207, 7
      %210 = vset.pattern.permute.xlu0 %v208
      %211 = vperm.xlu0 %210, %v206
      %v212 = vpop.permute.xlu0 %211
      %v213 = vperm.slane %v204, 1
      %v214 = vlaneseq
      %v215 = vshrl.u32 %v214, 7
      %217 = vset.pattern.permute.xlu0 %v215
      %218 = vperm.xlu0 %217, %v213
      %v219 = vpop.permute.xlu0 %218
      %v220 = vperm.slane %v204, 2
      %v221 = vlaneseq
      %v222 = vshrl.u32 %v221, 7
      %224 = vset.pattern.permute.xlu0 %v222
      %225 = vperm.xlu0 %224, %v220
      %v226 = vpop.permute.xlu0 %225
      %v227 = vperm.slane %v204, 3
      %v228 = vlaneseq
      %v229 = vshrl.u32 %v228, 7
      %231 = vset.pattern.permute.xlu0 %v229
      %232 = vperm.xlu0 %231, %v227
      %v233 = vpop.permute.xlu0 %232
      %v234 = vperm.slane %v204, 4
      %v235 = vlaneseq
      %v236 = vshrl.u32 %v235, 7
      %238 = vset.pattern.permute.xlu0 %v236
      %239 = vperm.xlu0 %238, %v234
      %v240 = vpop.permute.xlu0 %239
      %v241 = vperm.slane %v204, 5
      %v242 = vlaneseq
      %v243 = vshrl.u32 %v242, 7
      %245 = vset.pattern.permute.xlu0 %v243
      %246 = vperm.xlu0 %245, %v241
      %v247 = vpop.permute.xlu0 %246
      %v248 = vperm.slane %v204, 6
      %v249 = vlaneseq
      %v250 = vshrl.u32 %v249, 7
      %252 = vset.pattern.permute.xlu0 %v250
      %253 = vperm.xlu0 %252, %v248
      %v254 = vpop.permute.xlu0 %253
      %v255 = vperm.slane %v204, 7
      %v256 = vlaneseq
      %v257 = vshrl.u32 %v256, 7
      %259 = vset.pattern.permute.xlu0 %v257
      %260 = vperm.xlu0 %259, %v255
      %v261 = vpop.permute.xlu0 %260
      %v270 = vadd.f32 %v182, %v212
      %v271 = vadd.f32 %v185, %v219
      %v272 = vadd.f32 %v188, %v226
      %v273 = vadd.f32 %v191, %v233
      %v274 = vadd.f32 %v194, %v240
      %v275 = vadd.f32 %v197, %v247
      %v276 = vadd.f32 %v200, %v254
      %v277 = vadd.f32 %v203, %v261
      %286 = vset.pattern.permute.xlu0 0
      %287 = vperm.xlu0 %286, %v270
      %v288 = vpop.permute.xlu0 %287
      %289 = vset.pattern.permute.xlu0 0
      %290 = vperm.xlu0 %289, %v271
      %v291 = vpop.permute.xlu0 %290
      %292 = vset.pattern.permute.xlu0 0
      %293 = vperm.xlu0 %292, %v272
      %v294 = vpop.permute.xlu0 %293
      %295 = vset.pattern.permute.xlu0 0
      %296 = vperm.xlu0 %295, %v273
      %v297 = vpop.permute.xlu0 %296
      %298 = vset.pattern.permute.xlu0 0
      %299 = vperm.xlu0 %298, %v274
      %v300 = vpop.permute.xlu0 %299
      %301 = vset.pattern.permute.xlu0 0
      %302 = vperm.xlu0 %301, %v275
      %v303 = vpop.permute.xlu0 %302
      %304 = vset.pattern.permute.xlu0 0
      %305 = vperm.xlu0 %304, %v276
      %v306 = vpop.permute.xlu0 %305
      %307 = vset.pattern.permute.xlu0 0
      %308 = vperm.xlu0 %307, %v277
      %v309 = vpop.permute.xlu0 %308
      %v310 = vlaneseq
      %v311 = vand.u32 %v310, 127
      %v312 = vperm.slane %v288, %v311
      %v313 = vperm.slane %v291, %v311
      %v314 = vperm.slane %v294, %v311
      %v315 = vperm.slane %v297, %v311
      %v316 = vperm.slane %v300, %v311
      %v317 = vperm.slane %v303, %v311
      %v318 = vperm.slane %v306, %v311
      %v319 = vperm.slane %v309, %v311
      %vm320 = vcmask 1041409
      %v321 = vsel %vm320, %v313, %v312
      %vm322 = vcmask 1042434
      %v323 = vsel %vm322, %v314, %v321
      %vm324 = vcmask 1043459
      %v325 = vsel %vm324, %v315, %v323
      %vm326 = vcmask 1044484
      %v327 = vsel %vm326, %v316, %v325
      %vm328 = vcmask 1045509
      %v329 = vsel %vm328, %v317, %v327
      %vm330 = vcmask 1046534
      %v331 = vsel %vm330, %v318, %v329
      %vm332 = vcmask 1047559
      %v333 = vsel %vm332, %v319, %v331
      %vm335 = vcmask 64512
      %v336 = vsel %vm335, %v333, -inf
      %337 = vmax.xlane.f32.xlu0 %v336
      %v338 = vpop.xlane.xlu0 %337
      %v340 = vperm.slane %v338, 0
      %v341 = vperm.slane %v338, 1
      %v342 = vperm.slane %v338, 2
      %v343 = vperm.slane %v338, 3
      %v344 = vperm.slane %v338, 4
      %v345 = vperm.slane %v338, 5
      %v346 = vperm.slane %v338, 6
      %v347 = vperm.slane %v338, 7
      %v356 = vsub.f32 %v270, %v340
      %v357 = vsub.f32 %v271, %v341
      %v358 = vsub.f32 %v272, %v342
      %v359 = vsub.f32 %v273, %v343
      %v360 = vsub.f32 %v274, %v344
      %v361 = vsub.f32 %v275, %v345
      %v362 = vsub.f32 %v276, %v346
      %v363 = vsub.f32 %v277, %v347
      %v364 = vmul.f32 %v356, 1.442695
      %v365 = vpow.pop %v364
      %v366 = vmul.f32 %v357, 1.442695
      %v367 = vpow.pop %v366
      %v368 = vmul.f32 %v358, 1.442695
      %v369 = vpow.pop %v368
      %v370 = vmul.f32 %v359, 1.442695
      %v371 = vpow.pop %v370
      %v372 = vmul.f32 %v360, 1.442695
      %v373 = vpow.pop %v372
      %v374 = vmul.f32 %v361, 1.442695
      %v375 = vpow.pop %v374
      %v376 = vmul.f32 %v362, 1.442695
      %v377 = vpow.pop %v376
      %v378 = vmul.f32 %v363, 1.442695
      %v379 = vpow.pop %v378
      %388 = vset.pattern.permute.xlu0 0
      %389 = vperm.xlu0 %388, %v365
      %v390 = vpop.permute.xlu0 %389
      %391 = vset.pattern.permute.xlu0 0
      %392 = vperm.xlu0 %391, %v367
      %v393 = vpop.permute.xlu0 %392
      %394 = vset.pattern.permute.xlu0 0
      %395 = vperm.xlu0 %394, %v369
      %v396 = vpop.permute.xlu0 %395
      %397 = vset.pattern.permute.xlu0 0
      %398 = vperm.xlu0 %397, %v371
      %v399 = vpop.permute.xlu0 %398
      %400 = vset.pattern.permute.xlu0 0
      %401 = vperm.xlu0 %400, %v373
      %v402 = vpop.permute.xlu0 %401
      %403 = vset.pattern.permute.xlu0 0
      %404 = vperm.xlu0 %403, %v375
      %v405 = vpop.permute.xlu0 %404
      %406 = vset.pattern.permute.xlu0 0
      %407 = vperm.xlu0 %406, %v377
      %v408 = vpop.permute.xlu0 %407
      %409 = vset.pattern.permute.xlu0 0
      %410 = vperm.xlu0 %409, %v379
      %v411 = vpop.permute.xlu0 %410
      %v412 = vperm.slane %v390, %v311
      %v413 = vperm.slane %v393, %v311
      %v414 = vperm.slane %v396, %v311
      %v415 = vperm.slane %v399, %v311
      %v416 = vperm.slane %v402, %v311
      %v417 = vperm.slane %v405, %v311
      %v418 = vperm.slane %v408, %v311
      %v419 = vperm.slane %v411, %v311
      %v420 = vsel %vm320, %v413, %v412
      %v421 = vsel %vm322, %v414, %v420
      %v422 = vsel %vm324, %v415, %v421
      %v423 = vsel %vm326, %v416, %v422
      %v424 = vsel %vm328, %v417, %v423
      %v425 = vsel %vm330, %v418, %v424
      %v426 = vsel %vm332, %v419, %v425
      %v428 = vsel %vm335, %v426, 0.0
      %429 = vadd.xlane.f32.xlu0 %v428
      %v430 = vpop.xlane.xlu0 %429
      %v431 = vrcp.pop %v430
      %v433 = vperm.slane %v431, 0
      %v434 = vperm.slane %v431, 1
      %v435 = vperm.slane %v431, 2
      %v436 = vperm.slane %v431, 3
      %v437 = vperm.slane %v431, 4
      %v438 = vperm.slane %v431, 5
      %v439 = vperm.slane %v431, 6
      %v440 = vperm.slane %v431, 7
      %v449 = vmul.f32 %v365, %v433
      %v450 = vmul.f32 %v367, %v434
      %v451 = vmul.f32 %v369, %v435
      %v452 = vmul.f32 %v371, %v436
      %v453 = vmul.f32 %v373, %v437
      %v454 = vmul.f32 %v375, %v438
      %v455 = vmul.f32 %v377, %v439
      %v456 = vmul.f32 %v379, %v440
      %458 = vset.pattern.permute.xlu0 0
      %459 = vperm.xlu0 %458, %v449
      %v460 = vpop.permute.xlu0 %459
      %463 = vset.pattern.permute.xlu0 0
      %464 = vperm.xlu0 %463, %v450
      %v465 = vpop.permute.xlu0 %464
      %468 = vset.pattern.permute.xlu0 0
      %469 = vperm.xlu0 %468, %v451
      %v470 = vpop.permute.xlu0 %469
      %473 = vset.pattern.permute.xlu0 0
      %474 = vperm.xlu0 %473, %v452
      %v475 = vpop.permute.xlu0 %474
      %478 = vset.pattern.permute.xlu0 0
      %479 = vperm.xlu0 %478, %v453
      %v480 = vpop.permute.xlu0 %479
      %483 = vset.pattern.permute.xlu0 0
      %484 = vperm.xlu0 %483, %v454
      %v485 = vpop.permute.xlu0 %484
      %488 = vset.pattern.permute.xlu0 0
      %489 = vperm.xlu0 %488, %v455
      %v490 = vpop.permute.xlu0 %489
      %493 = vset.pattern.permute.xlu0 0
      %494 = vperm.xlu0 %493, %v456
      %v495 = vpop.permute.xlu0 %494
      %v497 = vmul.f32 %v460, %v80
      %v498 = vmul.f32 %v465, %v81
      %v499 = vmul.f32 %v470, %v82
      %v500 = vmul.f32 %v475, %v83
      %v501 = vmul.f32 %v480, %v84
      %v502 = vmul.f32 %v485, %v85
      %v503 = vmul.f32 %v490, %v86
      %v504 = vmul.f32 %v495, %v87
      %v505 = vsel %vm94, %v497, 0.0
      %v506 = vrot.slane %v505, 4
      %v507 = vadd.f32 %v505, %v506
      %v508 = vrot.slane %v507, 2
      %v509 = vadd.f32 %v507, %v508
      %v510 = vrot.slane %v509, 1
      %v511 = vadd.f32 %v509, %v510
      %v512 = vsel %vm94, %v498, 0.0
      %v513 = vrot.slane %v512, 4
      %v514 = vadd.f32 %v512, %v513
      %v515 = vrot.slane %v514, 2
      %v516 = vadd.f32 %v514, %v515
      %v517 = vrot.slane %v516, 1
      %v518 = vadd.f32 %v516, %v517
      %v519 = vsel %vm94, %v499, 0.0
      %v520 = vrot.slane %v519, 4
      %v521 = vadd.f32 %v519, %v520
      %v522 = vrot.slane %v521, 2
      %v523 = vadd.f32 %v521, %v522
      %v524 = vrot.slane %v523, 1
      %v525 = vadd.f32 %v523, %v524
      %v526 = vsel %vm94, %v500, 0.0
      %v527 = vrot.slane %v526, 4
      %v528 = vadd.f32 %v526, %v527
      %v529 = vrot.slane %v528, 2
      %v530 = vadd.f32 %v528, %v529
      %v531 = vrot.slane %v530, 1
      %v532 = vadd.f32 %v530, %v531
      %v533 = vsel %vm94, %v501, 0.0
      %v534 = vrot.slane %v533, 4
      %v535 = vadd.f32 %v533, %v534
      %v536 = vrot.slane %v535, 2
      %v537 = vadd.f32 %v535, %v536
      %v538 = vrot.slane %v537, 1
      %v539 = vadd.f32 %v537, %v538
      %v540 = vsel %vm94, %v502, 0.0
      %v541 = vrot.slane %v540, 4
      %v542 = vadd.f32 %v540, %v541
      %v543 = vrot.slane %v542, 2
      %v544 = vadd.f32 %v542, %v543
      %v545 = vrot.slane %v544, 1
      %v546 = vadd.f32 %v544, %v545
      %v547 = vsel %vm94, %v503, 0.0
      %v548 = vrot.slane %v547, 4
      %v549 = vadd.f32 %v547, %v548
      %v550 = vrot.slane %v549, 2
      %v551 = vadd.f32 %v549, %v550
      %v552 = vrot.slane %v551, 1
      %v553 = vadd.f32 %v551, %v552
      %v554 = vsel %vm94, %v504, 0.0
      %v555 = vrot.slane %v554, 4
      %v556 = vadd.f32 %v554, %v555
      %v557 = vrot.slane %v556, 2
      %v558 = vadd.f32 %v556, %v557
      %v559 = vrot.slane %v558, 1
      %v560 = vadd.f32 %v558, %v559
      %v561 = vld [vmem:[%s5] sm:$0xff]
      %v562 = vld [vmem:[%s5 + $0x8] sm:$0xff]
      %v563 = vld [vmem:[%s6] sm:$0x1]
      %v565 = vperm.slane %v563, 0
      %v575 = vsel %vm320, %v518, %v511
      %v576 = vsel %vm322, %v525, %v575
      %v577 = vsel %vm324, %v532, %v576
      %v578 = vsel %vm326, %v539, %v577
      %v579 = vsel %vm328, %v546, %v578
      %v580 = vsel %vm330, %v553, %v579
      %v581 = vsel %vm332, %v560, %v580
      %v582 = vsel %vm94, %v581, 0
      %584 = vmatpush.msra.mxu0 0.0
      %585 = vmatpush.msra.mxu0 0.0
      %586 = vmatpush.msra.mxu0 0.0
      %587 = vmatpush.msra.mxu0 0.0
      %588 = vmatpush.msra.mxu0 0.0
      %589 = vmatpush.msra.mxu0 0.0
      %590 = vmatpush.msra.mxu0 0.0
      %591 = vmatpush.msra.mxu0 0.0
      %592 = vmatpush.msra.mxu0 0.0
      %593 = vmatpush.msra.mxu0 0.0
      %594 = vmatpush.msra.mxu0 0.0
      %595 = vmatpush.msra.mxu0 0.0
      %596 = vmatpush.msra.mxu0 0.0
      %597 = vmatpush.msra.mxu0 0.0
      %598 = vmatpush.msra.mxu0 %v562
      %599 = vmatpush.msra.mxu0 %v561
      %600 = vmatmul.f32.gmra.mxu0 %v582
      %v601 = vpop.f32.mrf.mxu0
      %v602 = vadd.f32 %v565, %v601
      %603 = vdwg.mxu0
      %v604 = vmax.f32 %v602, 0.0
      %605 = vst.msk [vmem:[#allocation2] sm:$0xff] %vm335, %v604
    $region53: #{tpu_custom_call.1} parent=1 // pred_fallthru
      _
    %v606 = vld [vmem:[#allocation2] sm:$0xff]
    %v607 = vld [vmem:[#allocation8] sm:$0xff]
    %v608 = vld [vmem:[#allocation8 + $0x8] sm:$0xff]
    %v609 = vld [vmem:[%s8] sm:$0x3]
    %v611 = vperm.slane %v609, 0
    %v612 = vperm.slane %v609, 1
    %vm615 = vcmask 64512
    %v617 = vsel %vm615, %v606, 0
    %619 = vmatpush.msra.mxu0 0.0
    %620 = vmatpush.msra.mxu0 0.0
    %621 = vmatpush.msra.mxu0 0.0
    %622 = vmatpush.msra.mxu0 0.0
    %623 = vmatpush.msra.mxu0 0.0
    %624 = vmatpush.msra.mxu0 0.0
    %625 = vmatpush.msra.mxu0 0.0
    %626 = vmatpush.msra.mxu0 0.0
    %627 = vmatpush.msra.mxu0 0.0
    %628 = vmatpush.msra.mxu0 0.0
    %629 = vmatpush.msra.mxu0 0.0
    %630 = vmatpush.msra.mxu0 0.0
    %631 = vmatpush.msra.mxu0 0.0
    %632 = vmatpush.msra.mxu0 0.0
    %633 = vmatpush.msra.mxu0 0.0
    %634 = vmatpush.msra.mxu0 %v607
    %635 = vmatmul.f32.gmra.mxu0 %v617
    %v636 = vpop.f32.mrf.mxu0
    %v637 = vadd.f32 %v611, %v636
    %638 = vdwg.mxu0
    %639 = vmatpush.msra.mxu0 0.0
    %640 = vmatpush.msra.mxu0 0.0
    %641 = vmatpush.msra.mxu0 0.0
    %642 = vmatpush.msra.mxu0 0.0
    %643 = vmatpush.msra.mxu0 0.0
    %644 = vmatpush.msra.mxu0 0.0
    %645 = vmatpush.msra.mxu0 0.0
    %646 = vmatpush.msra.mxu0 0.0
    %647 = vmatpush.msra.mxu0 0.0
    %648 = vmatpush.msra.mxu0 0.0
    %649 = vmatpush.msra.mxu0 0.0
    %650 = vmatpush.msra.mxu0 0.0
    %651 = vmatpush.msra.mxu0 0.0
    %652 = vmatpush.msra.mxu0 0.0
    %653 = vmatpush.msra.mxu0 0.0
    %654 = vmatpush.msra.mxu0 %v608
    %655 = vmatmul.f32.gmra.mxu0 %v617
    %v656 = vpop.f32.mrf.mxu0
    %v657 = vadd.f32 %v612, %v656
    %658 = vdwg.mxu0
    %659 = vst [vmem:[#allocation9] sm:$0xff] %v637
    %660 = vst [vmem:[#allocation9 + $0x8] sm:$0xff] %v657
    // Predicated region
    $region54: #{tpu_custom_call.1} parent=1 // pred_check
      _
    $region55: #{tpu_custom_call.1} parent=1 // pred_check_branch
      %662 = sbr.rel (0) target = $region57
    $region56: #{tpu_custom_call.1} parent=1 // pred_region
      %664 = vsyncadd [#allocation5], 0
      %s666 = sshll.u32 [#allocation9], 4
      %s667 = int_to_ptr.vmem [resolvable:$true] %s666
      %s668 = sshll.u32 %s9, 4
      %s669 = int_to_ptr.hbm [resolvable:$true] %s668
      %671 = dma.vmem_to_hbm [thread:$0]  %s667, 256, %s669, [#allocation5]
    $region57: #{tpu_custom_call.1} parent=1 // pred_fallthru
      _
    // Predicated region
    $region58: #{tpu_custom_call.1} parent=1 // pred_check
      _
    $region59: #{tpu_custom_call.1} parent=1 // pred_check_branch
      %673 = sbr.rel (0) target = $region61
    $region60: #{tpu_custom_call.1} parent=1 // pred_region
      %675 = dma.done [#allocation5], 256
    $region61: #{tpu_custom_call.1} parent=1 // pred_fallthru
      _
    %676 = vsyncpa [#allocation4], 1
    %677 = vsyncpa [#allocation7], 1
    %678 = vsyncpa [#allocation5], 1

// kernel: tpu_custom_call.1
$region0: #{tpu_custom_call.1}
  #allocation0 [shape = 'u32[]', space=smem, size = 0x4, offset = 0x4, fixed_abs, tag = 'smem constant byte address 0x4 - core index']
  #allocation1 [shape = 'u32[72,128]{1,0:T(1,128)}', space=vmem, size = 0x9000, scoped, tag = 'internal scratch']
  #allocation2 [shape = 'f32[8,8]{1,0:T(8,128)}', space=vmem, size = 0x1000, scoped, tag = 'scratch operand']
  %s0 = inlined_call_operand.hbm [shape: f32[8,8,16], index: 0, kind: input, shape index: {}]
  %s1 = inlined_call_operand.vmem [shape: f32[8,8], index: 1, kind: input, shape index: {}]
  %s2 = inlined_call_operand.vmem [shape: f32[16,16], index: 2, kind: input, shape index: {}]
  %s3 = inlined_call_operand.hbm [shape: f32[1,16], index: 3, kind: input, shape index: {}]
  %s4 = inlined_call_operand.vmem [shape: f32[1,16], index: 4, kind: input, shape index: {}]
  %s5 = inlined_call_operand.vmem [shape: f32[16,8], index: 5, kind: input, shape index: {}]
  %s6 = inlined_call_operand.vmem [shape: f32[1,8], index: 6, kind: input, shape index: {}]
  %s7 = inlined_call_operand.hbm [shape: f32[8,256], index: 7, kind: input, shape index: {}]
  %s8 = inlined_call_operand.vmem [shape: f32[1,256], index: 8, kind: input, shape index: {}]
  %s9 = inlined_call_operand.hbm [shape: f32[8,256], index: 9, kind: output, shape index: {}]
  %s10 = sld [smem:[#allocation0]]
  $region62: #{tpu_custom_call.1} parent=0
    _
  %s12 = ssub.s32 1, %s10
  %s13 = scalar_select 0, %s12, %s10
  $region1: #{tpu_custom_call.1} parent=0
    #allocation3 [shape = 'u8[32768]{0}', space=vmem, size = 0x8000, scoped, tag = 'input window, operand 0, single buffered']
    #allocation4 [shape = 's32[1]{0}', space=sflag, size = 0x4, scoped, tag = 'scoped memory for tpu_custom_call.1']
    #allocation5 [shape = 's32[1]{0}', space=sflag, size = 0x4, scoped, tag = 'scoped memory for tpu_custom_call.1']
    #allocation6 [shape = 'u8[512]{0}', space=vmem, size = 0x400, scoped, tag = 'input window, operand 3, single buffered']
    #allocation7 [shape = 's32[1]{0}', space=sflag, size = 0x4, scoped, tag = 'scoped memory for tpu_custom_call.1']
    #allocation8 [shape = 'u8[8192]{0}', space=vmem, size = 0x2000, scoped, tag = 'input window, operand 7, single buffered']
    #allocation9 [shape = 'u8[8192]{0}', space=vmem, size = 0x2000, scoped, tag = 'output window, operand 0, single buffered']
    %14 = vsyncpa [#allocation4], 0
    %15 = vsyncpa [#allocation7], 0
    %16 = vsyncpa [#allocation5], 0
    // Predicated region
    $region2: #{tpu_custom_call.1} parent=1 // pred_check
      _
    $region3: #{tpu_custom_call.1} parent=1 // pred_check_branch
      %18 = sbr.rel (0) target = $region5
    $region4: #{tpu_custom_call.1} parent=1 // pred_region
      %20 = vsyncadd [#allocation4], 0
      %s21 = sshll.u32 %s0, 4
      %s22 = int_to_ptr.hbm [resolvable:$true] %s21
      %s23 = sshll.u32 [#allocation3], 4
      %s24 = int_to_ptr.vmem [resolvable:$true] %s23
      %29 = dma.hbm_to_vmem [thread:$0]  %s22, 1024, %s24, [#allocation4], 128, 128, 8
    $region5: #{tpu_custom_call.1} parent=1 // pred_fallthru
      _
    // Predicated region
    $region6: #{tpu_custom_call.1} parent=1 // pred_check
      _
    $region7: #{tpu_custom_call.1} parent=1 // pred_check_branch
      %31 = sbr.rel (0) target = $region9
    $region8: #{tpu_custom_call.1} parent=1 // pred_region
      _
    $region9: #{tpu_custom_call.1} parent=1 // pred_fallthru
      _
    // Predicated region
    $region10: #{tpu_custom_call.1} parent=1 // pred_check
      _
    $region11: #{tpu_custom_call.1} parent=1 // pred_check_branch
      %33 = sbr.rel (0) target = $region13
    $region12: #{tpu_custom_call.1} parent=1 // pred_region
      _
    $region13: #{tpu_custom_call.1} parent=1 // pred_fallthru
      _
    // Predicated region
    $region14: #{tpu_custom_call.1} parent=1 // pred_check
      _
    $region15: #{tpu_custom_call.1} parent=1 // pred_check_branch
      %35 = sbr.rel (0) target = $region17
    $region16: #{tpu_custom_call.1} parent=1 // pred_region
      %37 = vsyncadd [#allocation7], 0
      %s39 = sshll.u32 %s3, 4
      %s40 = int_to_ptr.hbm [resolvable:$true] %s39
      %s41 = sshll.u32 [#allocation6], 4
      %s42 = int_to_ptr.vmem [resolvable:$true] %s41
      %44 = dma.hbm_to_vmem [thread:$0]  %s40, 16, %s42, [#allocation7]
    $region17: #{tpu_custom_call.1} parent=1 // pred_fallthru
      _
    // Predicated region
    $region18: #{tpu_custom_call.1} parent=1 // pred_check
      _
    $region19: #{tpu_custom_call.1} parent=1 // pred_check_branch
      %46 = sbr.rel (0) target = $region21
    $region20: #{tpu_custom_call.1} parent=1 // pred_region
      _
    $region21: #{tpu_custom_call.1} parent=1 // pred_fallthru
      _
    // Predicated region
    $region22: #{tpu_custom_call.1} parent=1 // pred_check
      _
    $region23: #{tpu_custom_call.1} parent=1 // pred_check_branch
      %48 = sbr.rel (0) target = $region25
    $region24: #{tpu_custom_call.1} parent=1 // pred_region
      _
    $region25: #{tpu_custom_call.1} parent=1 // pred_fallthru
      _
    // Predicated region
    $region26: #{tpu_custom_call.1} parent=1 // pred_check
      _
    $region27: #{tpu_custom_call.1} parent=1 // pred_check_branch
      %50 = sbr.rel (0) target = $region29
    $region28: #{tpu_custom_call.1} parent=1 // pred_region
      _
    $region29: #{tpu_custom_call.1} parent=1 // pred_fallthru
      _
    // Predicated region
    $region30: #{tpu_custom_call.1} parent=1 // pred_check
      _
    $region31: #{tpu_custom_call.1} parent=1 // pred_check_branch
      %52 = sbr.rel (0) target = $region33
    $region32: #{tpu_custom_call.1} parent=1 // pred_region
      %54 = vsyncadd [#allocation7], 0
      %s56 = sshll.u32 %s7, 4
      %s57 = int_to_ptr.hbm [resolvable:$true] %s56
      %s58 = sshll.u32 [#allocation8], 4
      %s59 = int_to_ptr.vmem [resolvable:$true] %s58
      %61 = dma.hbm_to_vmem [thread:$0]  %s57, 256, %s59, [#allocation7]
    $region33: #{tpu_custom_call.1} parent=1 // pred_fallthru
      _
    // Predicated region
    $region34: #{tpu_custom_call.1} parent=1 // pred_check
      _
    $region35: #{tpu_custom_call.1} parent=1 // pred_check_branch
      %63 = sbr.rel (0) target = $region37
    $region36: #{tpu_custom_call.1} parent=1 // pred_region
      _
    $region37: #{tpu_custom_call.1} parent=1 // pred_fallthru
      _
    // Predicated region
    $region38: #{tpu_custom_call.1} parent=1 // pred_check
      _
    $region39: #{tpu_custom_call.1} parent=1 // pred_check_branch
      %65 = sbr.rel (0) target = $region41
    $region40: #{tpu_custom_call.1} parent=1 // pred_region
      %67 = dma.done [#allocation4], 1024
    $region41: #{tpu_custom_call.1} parent=1 // pred_fallthru
      _
    // Predicated region
    $region42: #{tpu_custom_call.1} parent=1 // pred_check
      _
    $region43: #{tpu_custom_call.1} parent=1 // pred_check_branch
      %69 = sbr.rel (0) target = $region45
    $region44: #{tpu_custom_call.1} parent=1 // pred_region
      %71 = dma.done [#allocation7], 16
    $region45: #{tpu_custom_call.1} parent=1 // pred_fallthru
      _
    // Predicated region
    $region46: #{tpu_custom_call.1} parent=1 // pred_check
      _
    $region47: #{tpu_custom_call.1} parent=1 // pred_check_branch
      %73 = sbr.rel (0) target = $region49
    $region48: #{tpu_custom_call.1} parent=1 // pred_region
      %75 = dma.done [#allocation7], 256
    $region49: #{tpu_custom_call.1} parent=1 // pred_fallthru
      _
    %p76 = scmp.eq.s32.totalorder 0, 0
    // Predicated region
    $region50: #{tpu_custom_call.1} parent=1 // pred_check
      %p77 = pneg %p76
    $region51: #{tpu_custom_call.1} parent=1 // pred_check_branch
      %79 = sbr.rel (%p77) target = $region53
    $region52: #{tpu_custom_call.1} parent=1 // pred_region
      %v80 = vld [vmem:[#allocation3] sm:$0xff]
      %v81 = vld [vmem:[#allocation3 + $0x8] sm:$0xff]
      %v82 = vld [vmem:[#allocation3 + $0x10] sm:$0xff]
      %v83 = vld [vmem:[#allocation3 + $0x18] sm:$0xff]
      %v84 = vld [vmem:[#allocation3 + $0x20] sm:$0xff]
      %v85 = vld [vmem:[#allocation3 + $0x28] sm:$0xff]
      %v86 = vld [vmem:[#allocation3 + $0x30] sm:$0xff]
      %v87 = vld [vmem:[#allocation3 + $0x38] sm:$0xff]
      %v88 = vld [vmem:[%s2] sm:$0xff]
      %v89 = vld [vmem:[%s2 + $0x8] sm:$0xff]
      %v90 = vld [vmem:[#allocation6] sm:$0x1]
      %v92 = vperm.slane %v90, 0
      %vm94 = vcmask 130048
      %v96 = vsel %vm94, %v80, 0
      %v99 = vsel %vm94, %v81, 0
      %v102 = vsel %vm94, %v82, 0
      %v105 = vsel %vm94, %v83, 0
      %v108 = vsel %vm94, %v84, 0
      %v111 = vsel %vm94, %v85, 0
      %v114 = vsel %vm94, %v86, 0
      %v117 = vsel %vm94, %v87, 0
      %119 = vmatpush.msra.mxu0 0.0
      %120 = vmatpush.msra.mxu0 0.0
      %121 = vmatpush.msra.mxu0 0.0
      %122 = vmatpush.msra.mxu0 0.0
      %123 = vmatpush.msra.mxu0 0.0
      %124 = vmatpush.msra.mxu0 0.0
      %125 = vmatpush.msra.mxu0 0.0
      %126 = vmatpush.msra.mxu0 0.0
      %127 = vmatpush.msra.mxu0 0.0
      %128 = vmatpush.msra.mxu0 0.0
      %129 = vmatpush.msra.mxu0 0.0
      %130 = vmatpush.msra.mxu0 0.0
      %131 = vmatpush.msra.mxu0 0.0
      %132 = vmatpush.msra.mxu0 0.0
      %133 = vmatpush.msra.mxu0 %v89
      %134 = vmatpush.msra.mxu0 %v88
      %135 = vmatmul.f32.gmra.mxu0 %v96
      %v136 = vpop.f32.mrf.mxu0
      %v137 = vadd.f32 %v92, %v136
      %138 = vmatmul.f32.gmra.mxu0 %v99
      %v139 = vpop.f32.mrf.mxu0
      %v140 = vadd.f32 %v92, %v139
      %141 = vmatmul.f32.gmra.mxu0 %v102
      %v142 = vpop.f32.mrf.mxu0
      %v143 = vadd.f32 %v92, %v142
      %144 = vmatmul.f32.gmra.mxu0 %v105
      %v145 = vpop.f32.mrf.mxu0
      %v146 = vadd.f32 %v92, %v145
      %147 = vmatmul.f32.gmra.mxu0 %v108
      %v148 = vpop.f32.mrf.mxu0
      %v149 = vadd.f32 %v92, %v148
      %150 = vmatmul.f32.gmra.mxu0 %v111
      %v151 = vpop.f32.mrf.mxu0
      %v152 = vadd.f32 %v92, %v151
      %153 = vmatmul.f32.gmra.mxu0 %v114
      %v154 = vpop.f32.mrf.mxu0
      %v155 = vadd.f32 %v92, %v154
      %156 = vmatmul.f32.gmra.mxu0 %v117
      %v157 = vpop.f32.mrf.mxu0
      %v158 = vadd.f32 %v92, %v157
      %159 = vdwg.mxu0
      %v160 = vmax.f32 %v137, 0.0
      %v161 = vmax.f32 %v140, 0.0
      %v162 = vmax.f32 %v143, 0.0
      %v163 = vmax.f32 %v146, 0.0
      %v164 = vmax.f32 %v149, 0.0
      %v165 = vmax.f32 %v152, 0.0
      %v166 = vmax.f32 %v155, 0.0
      %v167 = vmax.f32 %v158, 0.0
      %v168 = vld [vmem:[%s4] sm:$0x1]
      %v170 = vperm.slane %v168, 0
      %v172 = vmul.f32 %v160, %v170
      %v173 = vmul.f32 %v161, %v170
      %v174 = vmul.f32 %v162, %v170
      %v175 = vmul.f32 %v163, %v170
      %v176 = vmul.f32 %v164, %v170
      %v177 = vmul.f32 %v165, %v170
      %v178 = vmul.f32 %v166, %v170
      %v179 = vmul.f32 %v167, %v170
      %v180 = vsel %vm94, %v172, 0.0
      %181 = vadd.xlane.f32.xlu0 %v180
      %v182 = vpop.xlane.xlu0 %181
      %v183 = vsel %vm94, %v173, 0.0
      %184 = vadd.xlane.f32.xlu0 %v183
      %v185 = vpop.xlane.xlu0 %184
      %v186 = vsel %vm94, %v174, 0.0
      %187 = vadd.xlane.f32.xlu0 %v186
      %v188 = vpop.xlane.xlu0 %187
      %v189 = vsel %vm94, %v175, 0.0
      %190 = vadd.xlane.f32.xlu0 %v189
      %v191 = vpop.xlane.xlu0 %190
      %v192 = vsel %vm94, %v176, 0.0
      %193 = vadd.xlane.f32.xlu0 %v192
      %v194 = vpop.xlane.xlu0 %193
      %v195 = vsel %vm94, %v177, 0.0
      %196 = vadd.xlane.f32.xlu0 %v195
      %v197 = vpop.xlane.xlu0 %196
      %v198 = vsel %vm94, %v178, 0.0
      %199 = vadd.xlane.f32.xlu0 %v198
      %v200 = vpop.xlane.xlu0 %199
      %v201 = vsel %vm94, %v179, 0.0
      %202 = vadd.xlane.f32.xlu0 %v201
      %v203 = vpop.xlane.xlu0 %202
      %v204 = vld [vmem:[%s1] sm:$0xff]
      %v206 = vperm.slane %v204, 0
      %v207 = vlaneseq
      %v208 = vshrl.u32 %v207, 7
      %210 = vset.pattern.permute.xlu0 %v208
      %211 = vperm.xlu0 %210, %v206
      %v212 = vpop.permute.xlu0 %211
      %v213 = vperm.slane %v204, 1
      %v214 = vlaneseq
      %v215 = vshrl.u32 %v214, 7
      %217 = vset.pattern.permute.xlu0 %v215
      %218 = vperm.xlu0 %217, %v213
      %v219 = vpop.permute.xlu0 %218
      %v220 = vperm.slane %v204, 2
      %v221 = vlaneseq
      %v222 = vshrl.u32 %v221, 7
      %224 = vset.pattern.permute.xlu0 %v222
      %225 = vperm.xlu0 %224, %v220
      %v226 = vpop.permute.xlu0 %225
      %v227 = vperm.slane %v204, 3
      %v228 = vlaneseq
      %v229 = vshrl.u32 %v228, 7
      %231 = vset.pattern.permute.xlu0 %v229
      %232 = vperm.xlu0 %231, %v227
      %v233 = vpop.permute.xlu0 %232
      %v234 = vperm.slane %v204, 4
      %v235 = vlaneseq
      %v236 = vshrl.u32 %v235, 7
      %238 = vset.pattern.permute.xlu0 %v236
      %239 = vperm.xlu0 %238, %v234
      %v240 = vpop.permute.xlu0 %239
      %v241 = vperm.slane %v204, 5
      %v242 = vlaneseq
      %v243 = vshrl.u32 %v242, 7
      %245 = vset.pattern.permute.xlu0 %v243
      %246 = vperm.xlu0 %245, %v241
      %v247 = vpop.permute.xlu0 %246
      %v248 = vperm.slane %v204, 6
      %v249 = vlaneseq
      %v250 = vshrl.u32 %v249, 7
      %252 = vset.pattern.permute.xlu0 %v250
      %253 = vperm.xlu0 %252, %v248
      %v254 = vpop.permute.xlu0 %253
      %v255 = vperm.slane %v204, 7
      %v256 = vlaneseq
      %v257 = vshrl.u32 %v256, 7
      %259 = vset.pattern.permute.xlu0 %v257
      %260 = vperm.xlu0 %259, %v255
      %v261 = vpop.permute.xlu0 %260
      %v270 = vadd.f32 %v182, %v212
      %v271 = vadd.f32 %v185, %v219
      %v272 = vadd.f32 %v188, %v226
      %v273 = vadd.f32 %v191, %v233
      %v274 = vadd.f32 %v194, %v240
      %v275 = vadd.f32 %v197, %v247
      %v276 = vadd.f32 %v200, %v254
      %v277 = vadd.f32 %v203, %v261
      %286 = vset.pattern.permute.xlu0 0
      %287 = vperm.xlu0 %286, %v270
      %v288 = vpop.permute.xlu0 %287
      %289 = vset.pattern.permute.xlu0 0
      %290 = vperm.xlu0 %289, %v271
      %v291 = vpop.permute.xlu0 %290
      %292 = vset.pattern.permute.xlu0 0
      %293 = vperm.xlu0 %292, %v272
      %v294 = vpop.permute.xlu0 %293
      %295 = vset.pattern.permute.xlu0 0
      %296 = vperm.xlu0 %295, %v273
      %v297 = vpop.permute.xlu0 %296
      %298 = vset.pattern.permute.xlu0 0
      %299 = vperm.xlu0 %298, %v274
      %v300 = vpop.permute.xlu0 %299
      %301 = vset.pattern.permute.xlu0 0
      %302 = vperm.xlu0 %301, %v275
      %v303 = vpop.permute.xlu0 %302
      %304 = vset.pattern.permute.xlu0 0
      %305 = vperm.xlu0 %304, %v276
      %v306 = vpop.permute.xlu0 %305
      %307 = vset.pattern.permute.xlu0 0
      %308 = vperm.xlu0 %307, %v277
      %v309 = vpop.permute.xlu0 %308
      %v310 = vlaneseq
      %v311 = vand.u32 %v310, 127
      %v312 = vperm.slane %v288, %v311
      %v313 = vperm.slane %v291, %v311
      %v314 = vperm.slane %v294, %v311
      %v315 = vperm.slane %v297, %v311
      %v316 = vperm.slane %v300, %v311
      %v317 = vperm.slane %v303, %v311
      %v318 = vperm.slane %v306, %v311
      %v319 = vperm.slane %v309, %v311
      %vm320 = vcmask 1041409
      %v321 = vsel %vm320, %v313, %v312
      %vm322 = vcmask 1042434
      %v323 = vsel %vm322, %v314, %v321
      %vm324 = vcmask 1043459
      %v325 = vsel %vm324, %v315, %v323
      %vm326 = vcmask 1044484
      %v327 = vsel %vm326, %v316, %v325
      %vm328 = vcmask 1045509
      %v329 = vsel %vm328, %v317, %v327
      %vm330 = vcmask 1046534
      %v331 = vsel %vm330, %v318, %v329
      %vm332 = vcmask 1047559
      %v333 = vsel %vm332, %v319, %v331
      %vm335 = vcmask 64512
      %v336 = vsel %vm335, %v333, -inf
      %337 = vmax.xlane.f32.xlu0 %v336
      %v338 = vpop.xlane.xlu0 %337
      %v340 = vperm.slane %v338, 0
      %v341 = vperm.slane %v338, 1
      %v342 = vperm.slane %v338, 2
      %v343 = vperm.slane %v338, 3
      %v344 = vperm.slane %v338, 4
      %v345 = vperm.slane %v338, 5
      %v346 = vperm.slane %v338, 6
      %v347 = vperm.slane %v338, 7
      %v356 = vsub.f32 %v270, %v340
      %v357 = vsub.f32 %v271, %v341
      %v358 = vsub.f32 %v272, %v342
      %v359 = vsub.f32 %v273, %v343
      %v360 = vsub.f32 %v274, %v344
      %v361 = vsub.f32 %v275, %v345
      %v362 = vsub.f32 %v276, %v346
      %v363 = vsub.f32 %v277, %v347
      %v364 = vmul.f32 %v356, 1.442695
      %v365 = vpow.pop %v364
      %v366 = vmul.f32 %v357, 1.442695
      %v367 = vpow.pop %v366
      %v368 = vmul.f32 %v358, 1.442695
      %v369 = vpow.pop %v368
      %v370 = vmul.f32 %v359, 1.442695
      %v371 = vpow.pop %v370
      %v372 = vmul.f32 %v360, 1.442695
      %v373 = vpow.pop %v372
      %v374 = vmul.f32 %v361, 1.442695
      %v375 = vpow.pop %v374
      %v376 = vmul.f32 %v362, 1.442695
      %v377 = vpow.pop %v376
      %v378 = vmul.f32 %v363, 1.442695
      %v379 = vpow.pop %v378
      %388 = vset.pattern.permute.xlu0 0
      %389 = vperm.xlu0 %388, %v365
      %v390 = vpop.permute.xlu0 %389
      %391 = vset.pattern.permute.xlu0 0
      %392 = vperm.xlu0 %391, %v367
      %v393 = vpop.permute.xlu0 %392
      %394 = vset.pattern.permute.xlu0 0
      %395 = vperm.xlu0 %394, %v369
      %v396 = vpop.permute.xlu0 %395
      %397 = vset.pattern.permute.xlu0 0
      %398 = vperm.xlu0 %397, %v371
      %v399 = vpop.permute.xlu0 %398
      %400 = vset.pattern.permute.xlu0 0
      %401 = vperm.xlu0 %400, %v373
      %v402 = vpop.permute.xlu0 %401
      %403 = vset.pattern.permute.xlu0 0
      %404 = vperm.xlu0 %403, %v375
      %v405 = vpop.permute.xlu0 %404
      %406 = vset.pattern.permute.xlu0 0
      %407 = vperm.xlu0 %406, %v377
      %v408 = vpop.permute.xlu0 %407
      %409 = vset.pattern.permute.xlu0 0
      %410 = vperm.xlu0 %409, %v379
      %v411 = vpop.permute.xlu0 %410
      %v412 = vperm.slane %v390, %v311
      %v413 = vperm.slane %v393, %v311
      %v414 = vperm.slane %v396, %v311
      %v415 = vperm.slane %v399, %v311
      %v416 = vperm.slane %v402, %v311
      %v417 = vperm.slane %v405, %v311
      %v418 = vperm.slane %v408, %v311
      %v419 = vperm.slane %v411, %v311
      %v420 = vsel %vm320, %v413, %v412
      %v421 = vsel %vm322, %v414, %v420
      %v422 = vsel %vm324, %v415, %v421
      %v423 = vsel %vm326, %v416, %v422
      %v424 = vsel %vm328, %v417, %v423
      %v425 = vsel %vm330, %v418, %v424
      %v426 = vsel %vm332, %v419, %v425
      %v428 = vsel %vm335, %v426, 0.0
      %429 = vadd.xlane.f32.xlu0 %v428
      %v430 = vpop.xlane.xlu0 %429
      %v431 = vrcp.pop %v430
      %v433 = vperm.slane %v431, 0
      %v434 = vperm.slane %v431, 1
      %v435 = vperm.slane %v431, 2
      %v436 = vperm.slane %v431, 3
      %v437 = vperm.slane %v431, 4
      %v438 = vperm.slane %v431, 5
      %v439 = vperm.slane %v431, 6
      %v440 = vperm.slane %v431, 7
      %v449 = vmul.f32 %v365, %v433
      %v450 = vmul.f32 %v367, %v434
      %v451 = vmul.f32 %v369, %v435
      %v452 = vmul.f32 %v371, %v436
      %v453 = vmul.f32 %v373, %v437
      %v454 = vmul.f32 %v375, %v438
      %v455 = vmul.f32 %v377, %v439
      %v456 = vmul.f32 %v379, %v440
      %458 = vset.pattern.permute.xlu0 0
      %459 = vperm.xlu0 %458, %v449
      %v460 = vpop.permute.xlu0 %459
      %463 = vset.pattern.permute.xlu0 0
      %464 = vperm.xlu0 %463, %v450
      %v465 = vpop.permute.xlu0 %464
      %468 = vset.pattern.permute.xlu0 0
      %469 = vperm.xlu0 %468, %v451
      %v470 = vpop.permute.xlu0 %469
      %473 = vset.pattern.permute.xlu0 0
      %474 = vperm.xlu0 %473, %v452
      %v475 = vpop.permute.xlu0 %474
      %478 = vset.pattern.permute.xlu0 0
      %479 = vperm.xlu0 %478, %v453
      %v480 = vpop.permute.xlu0 %479
      %483 = vset.pattern.permute.xlu0 0
      %484 = vperm.xlu0 %483, %v454
      %v485 = vpop.permute.xlu0 %484
      %488 = vset.pattern.permute.xlu0 0
      %489 = vperm.xlu0 %488, %v455
      %v490 = vpop.permute.xlu0 %489
      %493 = vset.pattern.permute.xlu0 0
      %494 = vperm.xlu0 %493, %v456
      %v495 = vpop.permute.xlu0 %494
      %v497 = vmul.f32 %v460, %v80
      %v498 = vmul.f32 %v465, %v81
      %v499 = vmul.f32 %v470, %v82
      %v500 = vmul.f32 %v475, %v83
      %v501 = vmul.f32 %v480, %v84
      %v502 = vmul.f32 %v485, %v85
      %v503 = vmul.f32 %v490, %v86
      %v504 = vmul.f32 %v495, %v87
      %v505 = vsel %vm94, %v497, 0.0
      %v506 = vrot.slane %v505, 4
      %v507 = vadd.f32 %v505, %v506
      %v508 = vrot.slane %v507, 2
      %v509 = vadd.f32 %v507, %v508
      %v510 = vrot.slane %v509, 1
      %v511 = vadd.f32 %v509, %v510
      %v512 = vsel %vm94, %v498, 0.0
      %v513 = vrot.slane %v512, 4
      %v514 = vadd.f32 %v512, %v513
      %v515 = vrot.slane %v514, 2
      %v516 = vadd.f32 %v514, %v515
      %v517 = vrot.slane %v516, 1
      %v518 = vadd.f32 %v516, %v517
      %v519 = vsel %vm94, %v499, 0.0
      %v520 = vrot.slane %v519, 4
      %v521 = vadd.f32 %v519, %v520
      %v522 = vrot.slane %v521, 2
      %v523 = vadd.f32 %v521, %v522
      %v524 = vrot.slane %v523, 1
      %v525 = vadd.f32 %v523, %v524
      %v526 = vsel %vm94, %v500, 0.0
      %v527 = vrot.slane %v526, 4
      %v528 = vadd.f32 %v526, %v527
      %v529 = vrot.slane %v528, 2
      %v530 = vadd.f32 %v528, %v529
      %v531 = vrot.slane %v530, 1
      %v532 = vadd.f32 %v530, %v531
      %v533 = vsel %vm94, %v501, 0.0
      %v534 = vrot.slane %v533, 4
      %v535 = vadd.f32 %v533, %v534
      %v536 = vrot.slane %v535, 2
      %v537 = vadd.f32 %v535, %v536
      %v538 = vrot.slane %v537, 1
      %v539 = vadd.f32 %v537, %v538
      %v540 = vsel %vm94, %v502, 0.0
      %v541 = vrot.slane %v540, 4
      %v542 = vadd.f32 %v540, %v541
      %v543 = vrot.slane %v542, 2
      %v544 = vadd.f32 %v542, %v543
      %v545 = vrot.slane %v544, 1
      %v546 = vadd.f32 %v544, %v545
      %v547 = vsel %vm94, %v503, 0.0
      %v548 = vrot.slane %v547, 4
      %v549 = vadd.f32 %v547, %v548
      %v550 = vrot.slane %v549, 2
      %v551 = vadd.f32 %v549, %v550
      %v552 = vrot.slane %v551, 1
      %v553 = vadd.f32 %v551, %v552
      %v554 = vsel %vm94, %v504, 0.0
      %v555 = vrot.slane %v554, 4
      %v556 = vadd.f32 %v554, %v555
      %v557 = vrot.slane %v556, 2
      %v558 = vadd.f32 %v556, %v557
      %v559 = vrot.slane %v558, 1
      %v560 = vadd.f32 %v558, %v559
      %v561 = vld [vmem:[%s5] sm:$0xff]
      %v562 = vld [vmem:[%s5 + $0x8] sm:$0xff]
      %v563 = vld [vmem:[%s6] sm:$0x1]
      %v565 = vperm.slane %v563, 0
      %v575 = vsel %vm320, %v518, %v511
      %v576 = vsel %vm322, %v525, %v575
      %v577 = vsel %vm324, %v532, %v576
      %v578 = vsel %vm326, %v539, %v577
      %v579 = vsel %vm328, %v546, %v578
      %v580 = vsel %vm330, %v553, %v579
      %v581 = vsel %vm332, %v560, %v580
      %v582 = vsel %vm94, %v581, 0
      %584 = vmatpush.msra.mxu0 0.0
      %585 = vmatpush.msra.mxu0 0.0
      %586 = vmatpush.msra.mxu0 0.0
      %587 = vmatpush.msra.mxu0 0.0
      %588 = vmatpush.msra.mxu0 0.0
      %589 = vmatpush.msra.mxu0 0.0
      %590 = vmatpush.msra.mxu0 0.0
      %591 = vmatpush.msra.mxu0 0.0
      %592 = vmatpush.msra.mxu0 0.0
      %593 = vmatpush.msra.mxu0 0.0
      %594 = vmatpush.msra.mxu0 0.0
      %595 = vmatpush.msra.mxu0 0.0
      %596 = vmatpush.msra.mxu0 0.0
      %597 = vmatpush.msra.mxu0 0.0
      %598 = vmatpush.msra.mxu0 %v562
      %599 = vmatpush.msra.mxu0 %v561
      %600 = vmatmul.f32.gmra.mxu0 %v582
      %v601 = vpop.f32.mrf.mxu0
      %v602 = vadd.f32 %v565, %v601
      %603 = vdwg.mxu0
      %v604 = vmax.f32 %v602, 0.0
      %605 = vst.msk [vmem:[#allocation2] sm:$0xff] %vm335, %v604
    $region53: #{tpu_custom_call.1} parent=1 // pred_fallthru
      _
    %v606 = vld [vmem:[#allocation2] sm:$0xff]
    %v607 = vld [vmem:[#allocation8] sm:$0xff]
    %v608 = vld [vmem:[#allocation8 + $0x8] sm:$0xff]
    %v609 = vld [vmem:[%s8] sm:$0x3]
    %v611 = vperm.slane %v609, 0
    %v612 = vperm.slane %v609, 1
    %vm615 = vcmask 64512
    %v617 = vsel %vm615, %v606, 0
    %619 = vmatpush.msra.mxu0 0.0
    %620 = vmatpush.msra.mxu0 0.0
    %621 = vmatpush.msra.mxu0 0.0
    %622 = vmatpush.msra.mxu0 0.0
    %623 = vmatpush.msra.mxu0 0.0
    %624 = vmatpush.msra.mxu0 0.0
    %625 = vmatpush.msra.mxu0 0.0
    %626 = vmatpush.msra.mxu0 0.0
    %627 = vmatpush.msra.mxu0 0.0
    %628 = vmatpush.msra.mxu0 0.0
    %629 = vmatpush.msra.mxu0 0.0
    %630 = vmatpush.msra.mxu0 0.0
    %631 = vmatpush.msra.mxu0 0.0
    %632 = vmatpush.msra.mxu0 0.0
    %633 = vmatpush.msra.mxu0 0.0
    %634 = vmatpush.msra.mxu0 %v607
    %635 = vmatmul.f32.gmra.mxu0 %v617
    %v636 = vpop.f32.mrf.mxu0
    %v637 = vadd.f32 %v611, %v636
    %638 = vdwg.mxu0
    %639 = vmatpush.msra.mxu0 0.0
    %640 = vmatpush.msra.mxu0 0.0
    %641 = vmatpush.msra.mxu0 0.0
    %642 = vmatpush.msra.mxu0 0.0
    %643 = vmatpush.msra.mxu0 0.0
    %644 = vmatpush.msra.mxu0 0.0
    %645 = vmatpush.msra.mxu0 0.0
    %646 = vmatpush.msra.mxu0 0.0
    %647 = vmatpush.msra.mxu0 0.0
    %648 = vmatpush.msra.mxu0 0.0
    %649 = vmatpush.msra.mxu0 0.0
    %650 = vmatpush.msra.mxu0 0.0
    %651 = vmatpush.msra.mxu0 0.0
    %652 = vmatpush.msra.mxu0 0.0
    %653 = vmatpush.msra.mxu0 0.0
    %654 = vmatpush.msra.mxu0 %v608
    %655 = vmatmul.f32.gmra.mxu0 %v617
    %v656 = vpop.f32.mrf.mxu0
    %v657 = vadd.f32 %v612, %v656
    %658 = vdwg.mxu0
    %659 = vst [vmem:[#allocation9] sm:$0xff] %v637
    %660 = vst [vmem:[#allocation9 + $0x8] sm:$0xff] %v657
    // Predicated region
    $region54: #{tpu_custom_call.1} parent=1 // pred_check
      _
    $region55: #{tpu_custom_call.1} parent=1 // pred_check_branch
      %662 = sbr.rel (0) target = $region57
    $region56: #{tpu_custom_call.1} parent=1 // pred_region
      %664 = vsyncadd [#allocation5], 0
      %s666 = sshll.u32 [#allocation9], 4
      %s667 = int_to_ptr.vmem [resolvable:$true] %s666
      %s668 = sshll.u32 %s9, 4
      %s669 = int_to_ptr.hbm [resolvable:$true] %s668
      %671 = dma.vmem_to_hbm [thread:$0]  %s667, 256, %s669, [#allocation5]
    $region57: #{tpu_custom_call.1} parent=1 // pred_fallthru
      _
    // Predicated region
    $region58: #{tpu_custom_call.1} parent=1 // pred_check
      _
    $region59: #{tpu_custom_call.1} parent=1 // pred_check_branch
      %673 = sbr.rel (0) target = $region61
    $region60: #{tpu_custom_call.1} parent=1 // pred_region
      %675 = dma.done [#allocation5], 256
    $region61: #{tpu_custom_call.1} parent=1 // pred_fallthru
      _
    %676 = vsyncpa [#allocation4], 1
    %677 = vsyncpa [#allocation7], 1
    %678 = vsyncpa [#allocation5], 1

</llo_original>
